<compile_context>
chip_gen: v7x
topology: tpu7x:2x2x1
jax: 0.10.0
libtpu: 0.0.40
codegen_flags: <defaults>
</compile_context>

<pallas_src>
import functools
import math

import jax
import jax.numpy as jnp
from jax import lax
from jax.experimental import pallas as pl
from jax.experimental.pallas import tpu as pltpu

# ---- small, module-consistent hyperparameters ----
B = 2               # batch
CONTEXT_LEN = 8     # L (context_length)
WIDTH = 32          # D (transformer_width)
HEADS = 4           # transformer_heads
HEAD_DIM = WIDTH // HEADS
LAYERS = 2          # transformer_layers
VOCAB = 64          # vocab_size
EMBED_DIM = 32      # embed_dim
TEA_WIDTH = 64      # tea_transformer_width (student projections active)
OUT_LANES = 128     # lane-dense packed output width: [llo(32) | emb(64) | pad(32)]
EPS = 1e-5
NEG_INF = -1e30     # finite "-inf" (robust even if a row were fully masked)


def _layernorm(x, w, b):
    mu = jnp.mean(x, axis=-1, keepdims=True)
    var = jnp.mean((x - mu) ** 2, axis=-1, keepdims=True)
    return (x - mu) * lax.rsqrt(var + EPS) * w + b


# --------------------------- fused kernel ---------------------------

def fused_text_encoder_kernel(
        act_dtype,      # static: QuickGELU compute dtype (bf16 on v6e/v7x, f32 on v5e)
        x0_ref,         # (N, D) f32   token_emb[ids] + pos   (== embedding_res)
        mask_ref,       # (N, N) f32   block-diagonal causal mask
        vecs_ref,       # (LAYERS, 8, 128) f32 lane-aligned per-layer vectors
        in_w_ref,       # (LAYERS, D, 3D) bf16  (Q columns pre-scaled by 1/sqrt(HD))
        out_w_ref,      # (LAYERS, D, D)  bf16
        fc_w_ref,       # (LAYERS, D, 4D) bf16
        proj_w_ref,     # (LAYERS, 4D, D) bf16
        fin_ref,        # (8, 128) f32  row0=ln_final_w, row1=ln_final_b, row2=padded emb bias
        tproj_ref,      # (D, 128) bf16 text_projection padded to lanes [0:E)
        embw_ref,       # (D, 128) bf16 embedding_projection W padded to lanes [E:E+TEA)
        out_ref):       # (N, 128) f32  [llo | emb | pad]
    N = B * CONTEXT_LEN
    D = WIDTH
    HD = HEAD_DIM
    bf16 = jnp.bfloat16

    x0 = x0_ref[...]                         # (N, D) f32
    mask = mask_ref[...]                     # (N, N) f32
    x = x0

    # ---- residual attention blocks (static / unrolled layer loop) ----
    for l in range(LAYERS):
        vp = vecs_ref[l]                     # (8, 128) f32, one vector per row
        ln1_w  = vp[0:1, 0:D]
        ln1_b  = vp[1:2, 0:D]
        in_b   = vp[2:3, 0:3 * D]            # Q segment already pre-scaled
        out_b  = vp[3:4, 0:D]
        ln2_w  = vp[4:5, 0:D]
        ln2_b  = vp[5:6, 0:D]
        fc_b   = vp[6:7, :]                  # (1, 4D) == (1, 128)
        proj_b = vp[7:8, 0:D]

        in_w   = in_w_ref[l]                 # (D, 3D) bf16
        out_w  = out_w_ref[l]                # (D, D)  bf16
        fc_w   = fc_w_ref[l]                 # (D, 4D) bf16
        proj_w = proj_w_ref[l]               # (4D, D) bf16

        # ----- multi-head self-attention (pre-LN) -----
        h = _layernorm(x, ln1_w, ln1_b)
        qkv = jnp.dot(h.astype(bf16), in_w,
                      preferred_element_type=jnp.float32) + in_b      # (N, 3D) f32
        qkv_b = qkv.astype(bf16)             # single cast per layer
        q = qkv_b[:, 0:D]                    # (N, D) bf16 (scale folded into weights)
        kT = qkv_b[:, D:2 * D].T             # (D, N) bf16: ONE transpose per layer
        v = qkv_b[:, 2 * D:3 * D]            # (N, D) bf16

        head_outs = []
        for hh in range(HEADS):              # 4 heads, unrolled
            qh  = q[:, hh * HD:(hh + 1) * HD]          # (N, HD) bf16
            kTh = kT[hh * HD:(hh + 1) * HD, :]         # (HD, N) bf16 sublane slice
            vh  = v[:, hh * HD:(hh + 1) * HD]          # (N, HD) bf16
            s = jnp.dot(qh, kTh, preferred_element_type=jnp.float32) + mask
            s = s - jnp.max(s, axis=-1, keepdims=True)
            p = jnp.exp(s)
            p = p * pl.reciprocal(jnp.sum(p, axis=-1, keepdims=True), approx=True)
            head_outs.append(jnp.dot(p.astype(bf16), vh,
                                     preferred_element_type=jnp.float32))  # (N, HD)

        # single out-projection matmul over all heads (lane concat is XLU-only)
        attn_in = jnp.concatenate(head_outs, axis=-1).astype(bf16)     # (N, D)
        attn = jnp.dot(attn_in, out_w, preferred_element_type=jnp.float32)
        x = x + attn + out_b

        # ----- MLP: c_fc -> QuickGELU -> c_proj -----
        h2 = _layernorm(x, ln2_w, ln2_b)
        m = jnp.dot(h2.astype(bf16), fc_w,
                    preferred_element_type=jnp.float32) + fc_b         # (N, 4D) f32
        ma = m.astype(act_dtype)
        ma = ma * jax.nn.sigmoid(1.702 * ma)          # CLIP QuickGELU
        m2 = jnp.dot(ma.astype(bf16), proj_w,
                     preferred_element_type=jnp.float32) + proj_b
        x = x + m2

    # ---- ln_final @ text_projection + student embedding_projection ----
    fin = fin_ref[...]
    lnf_w = fin[0:1, 0:D]
    lnf_b = fin[1:2, 0:D]
    out_bias = fin[2:3, :]                   # (1, 128): emb bias at lanes [E:E+TEA)

    hf = _layernorm(x, lnf_w, lnf_b)
    # both projection weights are pre-padded to 128 lanes -> one unmasked store
    packed = (jnp.dot(hf.astype(bf16), tproj_ref[...],
                      preferred_element_type=jnp.float32)
              + jnp.dot(x0.astype(bf16), embw_ref[...],
                        preferred_element_type=jnp.float32)
              + out_bias)                    # (N, 128) f32
    out_ref[...] = packed


# --------------------------- wrapper ---------------------------

def _activation_dtype():
    """bf16 QuickGELU only on chips with bf16 VPU/EUP (v6e / v7x)."""
    try:
        kind = jax.devices()[0].device_kind.lower()
    except Exception:
        kind = ""
    return jnp.bfloat16 if ("v6" in kind or "v7" in kind) else jnp.float32


def text_encoder_forward(text, params):
    Bn, L = text.shape
    N = Bn * L
    D = WIDTH

    # Embedding gather + positional add hoisted out of the kernel (XLA gather);
    # no serial per-row gather on the kernel's critical path.
    ids = text.reshape(N)
    x0 = params["tok_emb"][ids] + jnp.tile(params["pos"], (Bn, 1))    # (N, D) f32

    # block-diagonal causal mask (batch folded into rows), built once
    row = jnp.arange(N)[:, None]
    col = jnp.arange(N)[None, :]
    keep = (row // L == col // L) & (col <= row)
    mask = jnp.where(keep, 0.0, NEG_INF).astype(jnp.float32)          # (N, N)

    operands = (x0, mask, params["layer_vecs"],
                params["in_w"], params["out_w"], params["fc_w"], params["proj_w"],
                params["fin_vecs"], params["text_proj_pad"], params["emb_proj_pad"])

    packed = pl.pallas_call(
        functools.partial(fused_text_encoder_kernel, _activation_dtype()),
        out_shape=jax.ShapeDtypeStruct((N, OUT_LANES), jnp.float32),
        grid=(1,),
        in_specs=[pl.BlockSpec(a.shape, lambda i, _n=len(a.shape): (0,) * _n)
                  for a in operands],
        out_specs=pl.BlockSpec((N, OUT_LANES), lambda i: (0, 0)),
        compiler_params=pltpu.CompilerParams(
            dimension_semantics=("arbitrary",),
            vmem_limit_bytes=4 * 1024 * 1024,    # <100 KiB actually resident
        ),
    )(*operands)

    last_layer_output = packed[:, :EMBED_DIM].reshape(Bn, L, EMBED_DIM)
    embedding = packed[:, EMBED_DIM:EMBED_DIM + TEA_WIDTH].reshape(Bn, L, TEA_WIDTH)

    # last_representation = last_layer_output[arange(B), text.argmax(-1)]
    eot = jnp.argmax(text, axis=-1)
    last_representation = last_layer_output[jnp.arange(Bn), eot]      # (B, E)

    return {
        "last_representation": last_representation,
        "last_layer_output": last_layer_output,
        "embedding": embedding,
    }


# --------------------------- parameters (deterministic init) ---------------------------

def init_params(key):
    D = WIDTH
    attn_std = D ** -0.5
    proj_std = (D ** -0.5) * ((2 * LAYERS) ** -0.5)
    fc_std = (2 * D) ** -0.5
    scale = 1.0 / math.sqrt(HEAD_DIM)

    keys = iter(jax.random.split(key, 4 + 5 * LAYERS))
    nrm = lambda shape, std: std * jax.random.normal(next(keys), shape, jnp.float32)

    tok_emb = nrm((VOCAB, D), 0.02)
    pos = nrm((CONTEXT_LEN, D), 0.01)
    text_proj = nrm((D, EMBED_DIM), attn_std)
    emb_proj_w = nrm((D, TEA_WIDTH), 0.02)               # student embedding_projection
    emb_proj_b = jnp.zeros((TEA_WIDTH,), jnp.float32)

    ones = jnp.ones((D,), jnp.float32)
    zeros = jnp.zeros((D,), jnp.float32)

    def lane_row(v):                                      # pad a vector to 128 lanes
        return jnp.zeros((128,), jnp.float32).at[:v.shape[0]].set(v)

    in_w, out_w, fc_w, proj_w, vec_planes = [], [], [], [], []
    for _ in range(LAYERS):
        w_in = nrm((D, 3 * D), attn_std)
        b_in = nrm((3 * D,), attn_std)
        # fold 1/sqrt(HEAD_DIM) into the Q columns / Q bias (free at init time)
        w_in = w_in.at[:, :D].multiply(scale)
        b_in = b_in.at[:D].multiply(scale)
        in_w.append(w_in)
        out_w.append(nrm((D, D), proj_std))
        fc_w.append(nrm((D, 4 * D), fc_std))
        proj_w.append(nrm((4 * D, D), proj_std))
        # lane-aligned packed vectors: one logical vector per sublane row
        vec_planes.append(jnp.stack([
            lane_row(ones), lane_row(zeros),                      # ln1 w, b
            lane_row(b_in),                                       # attn in-proj bias
            lane_row(zeros),                                      # attn out-proj bias
            lane_row(ones), lane_row(zeros),                      # ln2 w, b
            lane_row(jnp.zeros((4 * D,), jnp.float32)),           # c_fc bias
            lane_row(zeros),                                      # c_proj bias
        ]))                                                       # (8, 128)

    # finals: row0 = ln_final w, row1 = ln_final b, row2 = emb bias padded to its lanes
    fin = jnp.zeros((8, 128), jnp.float32)
    fin = fin.at[0, :D].set(ones)
    fin = fin.at[1, :D].set(zeros)
    fin = fin.at[2, EMBED_DIM:EMBED_DIM + TEA_WIDTH].set(emb_proj_b)

    # projections padded to a 128-lane output slab: [ text_proj | emb_proj_w | 0 ]
    tproj_pad = jnp.zeros((D, OUT_LANES), jnp.float32).at[:, :EMBED_DIM].set(text_proj)
    embw_pad = jnp.zeros((D, OUT_LANES), jnp.float32).at[
        :, EMBED_DIM:EMBED_DIM + TEA_WIDTH].set(emb_proj_w)

    params = {
        "tok_emb": tok_emb,                                       # f32 (V, D)
        "pos": pos,                                               # f32 (L, D)
        "layer_vecs": jnp.stack(vec_planes),                      # f32 (LAYERS, 8, 128)
        "in_w": jnp.stack(in_w).astype(jnp.bfloat16),             # (LAYERS, D, 3D)
        "out_w": jnp.stack(out_w).astype(jnp.bfloat16),           # (LAYERS, D, D)
        "fc_w": jnp.stack(fc_w).astype(jnp.bfloat16),             # (LAYERS, D, 4D)
        "proj_w": jnp.stack(proj_w).astype(jnp.bfloat16),         # (LAYERS, 4D, D)
        "fin_vecs": fin,                                          # f32 (8, 128)
        "text_proj_pad": tproj_pad.astype(jnp.bfloat16),          # (D, 128)
        "emb_proj_pad": embw_pad.astype(jnp.bfloat16),            # (D, 128)
        # TODO(synk): hidden_projection over per-layer representations (ControlOutput.need_rep)
        # and attention_scores/attention_probs/value_map plumbing are not reproduced here.
    }
    return params


if __name__ == "__main__":
    root = jax.random.PRNGKey(0)
    k_param, k_text = jax.random.split(root)
    params = init_params(k_param)
    text = jax.random.randint(k_text, (B, CONTEXT_LEN), 0, VOCAB, dtype=jnp.int32)

    out = jax.jit(text_encoder_forward)(text, params)
    jax.block_until_ready(out)

    assert out["last_representation"].shape == (B, EMBED_DIM)
    assert out["last_layer_output"].shape == (B, CONTEXT_LEN, EMBED_DIM)
    assert out["embedding"].shape == (B, CONTEXT_LEN, TEA_WIDTH)
    print("KERNEL_OK")
</pallas_src>

<mosaic_0001>
module attributes {stable_mosaic.version = 11 : i64} {
  func.func @fused_text_encoder_kernel(%arg0: i32, %arg1: memref<16x32xf32, #tpu.memory_space<vmem>>, %arg2: memref<16x16xf32, #tpu.memory_space<vmem>>, %arg3: memref<2x8x128xf32, #tpu.memory_space<vmem>>, %arg4: memref<2x32x96xbf16, #tpu.memory_space<vmem>>, %arg5: memref<2x32x32xbf16, #tpu.memory_space<vmem>>, %arg6: memref<2x32x128xbf16, #tpu.memory_space<vmem>>, %arg7: memref<2x128x32xbf16, #tpu.memory_space<vmem>>, %arg8: memref<8x128xf32, #tpu.memory_space<vmem>>, %arg9: memref<32x128xbf16, #tpu.memory_space<vmem>>, %arg10: memref<32x128xbf16, #tpu.memory_space<vmem>>, %arg11: memref<16x128xf32, #tpu.memory_space<vmem>>) attributes {dimension_semantics = [#tpu.dimension_semantics<arbitrary>], iteration_bounds = array<i64: 1>, scalar_prefetch = 0 : i64, scratch_operands = 0 : i64, tpu.core_type = #tpu.core_type<tc>, window_params = [{pipeline_mode = #tpu.pipeline_mode<synchronous>, transform_indices = @transform_0, window_bounds = array<i64: 16, 32>}, {pipeline_mode = #tpu.pipeline_mode<synchronous>, transform_indices = @transform_1, window_bounds = array<i64: 16, 16>}, {pipeline_mode = #tpu.pipeline_mode<synchronous>, transform_indices = @transform_2, window_bounds = array<i64: 2, 8, 128>}, {pipeline_mode = #tpu.pipeline_mode<synchronous>, transform_indices = @transform_3, window_bounds = array<i64: 2, 32, 96>}, {pipeline_mode = #tpu.pipeline_mode<synchronous>, transform_indices = @transform_4, window_bounds = array<i64: 2, 32, 32>}, {pipeline_mode = #tpu.pipeline_mode<synchronous>, transform_indices = @transform_5, window_bounds = array<i64: 2, 32, 128>}, {pipeline_mode = #tpu.pipeline_mode<synchronous>, transform_indices = @transform_6, window_bounds = array<i64: 2, 128, 32>}, {pipeline_mode = #tpu.pipeline_mode<synchronous>, transform_indices = @transform_7, window_bounds = array<i64: 8, 128>}, {pipeline_mode = #tpu.pipeline_mode<synchronous>, transform_indices = @transform_8, window_bounds = array<i64: 32, 128>}, {pipeline_mode = #tpu.pipeline_mode<synchronous>, transform_indices = @transform_9, window_bounds = array<i64: 32, 128>}, {pipeline_mode = #tpu.pipeline_mode<synchronous>, transform_indices = @transform_10, window_bounds = array<i64: 16, 128>}]} {
    %c0 = arith.constant 0 : index
    %c0_0 = arith.constant 0 : index
    %0 = vector.load %arg1[%c0, %c0_0] : memref<16x32xf32, #tpu.memory_space<vmem>>, vector<16x32xf32>
    %c0_1 = arith.constant 0 : index
    %c0_2 = arith.constant 0 : index
    %1 = vector.load %arg2[%c0_1, %c0_2] : memref<16x16xf32, #tpu.memory_space<vmem>>, vector<16x16xf32>
    %c0_3 = arith.constant 0 : index
    %c0_4 = arith.constant 0 : index
    %c0_5 = arith.constant 0 : index
    %2 = vector.load %arg3[%c0_3, %c0_4, %c0_5] : memref<2x8x128xf32, #tpu.memory_space<vmem>>, vector<1x8x128xf32>
    %3 = vector.shape_cast %2 : vector<1x8x128xf32> to vector<8x128xf32>
    %4 = vector.extract_strided_slice %3 {offsets = [0, 0], sizes = [1, 32], strides = [1, 1]} : vector<8x128xf32> to vector<1x32xf32>
    %5 = vector.extract_strided_slice %3 {offsets = [1, 0], sizes = [1, 32], strides = [1, 1]} : vector<8x128xf32> to vector<1x32xf32>
    %6 = vector.extract_strided_slice %3 {offsets = [2, 0], sizes = [1, 96], strides = [1, 1]} : vector<8x128xf32> to vector<1x96xf32>
    %7 = vector.extract_strided_slice %3 {offsets = [3, 0], sizes = [1, 32], strides = [1, 1]} : vector<8x128xf32> to vector<1x32xf32>
    %8 = vector.extract_strided_slice %3 {offsets = [4, 0], sizes = [1, 32], strides = [1, 1]} : vector<8x128xf32> to vector<1x32xf32>
    %9 = vector.extract_strided_slice %3 {offsets = [5, 0], sizes = [1, 32], strides = [1, 1]} : vector<8x128xf32> to vector<1x32xf32>
    %10 = vector.extract_strided_slice %3 {offsets = [6, 0], sizes = [1, 128], strides = [1, 1]} : vector<8x128xf32> to vector<1x128xf32>
    %11 = vector.extract_strided_slice %3 {offsets = [7, 0], sizes = [1, 32], strides = [1, 1]} : vector<8x128xf32> to vector<1x32xf32>
    %c0_6 = arith.constant 0 : index
    %c0_7 = arith.constant 0 : index
    %c0_8 = arith.constant 0 : index
    %12 = vector.load %arg4[%c0_6, %c0_7, %c0_8] : memref<2x32x96xbf16, #tpu.memory_space<vmem>>, vector<1x32x96xbf16>
    %13 = vector.shape_cast %12 : vector<1x32x96xbf16> to vector<32x96xbf16>
    %c0_9 = arith.constant 0 : index
    %c0_10 = arith.constant 0 : index
    %c0_11 = arith.constant 0 : index
    %14 = vector.load %arg5[%c0_9, %c0_10, %c0_11] : memref<2x32x32xbf16, #tpu.memory_space<vmem>>, vector<1x32x32xbf16>
    %15 = vector.shape_cast %14 : vector<1x32x32xbf16> to vector<32x32xbf16>
    %c0_12 = arith.constant 0 : index
    %c0_13 = arith.constant 0 : index
    %c0_14 = arith.constant 0 : index
    %16 = vector.load %arg6[%c0_12, %c0_13, %c0_14] : memref<2x32x128xbf16, #tpu.memory_space<vmem>>, vector<1x32x128xbf16>
    %17 = vector.shape_cast %16 : vector<1x32x128xbf16> to vector<32x128xbf16>
    %c0_15 = arith.constant 0 : index
    %c0_16 = arith.constant 0 : index
    %c0_17 = arith.constant 0 : index
    %18 = vector.load %arg7[%c0_15, %c0_16, %c0_17] : memref<2x128x32xbf16, #tpu.memory_space<vmem>>, vector<1x128x32xbf16>
    %19 = vector.shape_cast %18 : vector<1x128x32xbf16> to vector<128x32xbf16>
    %cst = arith.constant dense<0.000000e+00> : vector<16xf32>
    %20 = vector.multi_reduction <add>, %0, %cst [1] : vector<16x32xf32> to vector<16xf32>
    %21 = vector.shape_cast %20 : vector<16xf32> to vector<16x1xf32>
    %cst_18 = arith.constant 3.200000e+01 : f32
    %22 = vector.broadcast %cst_18 : f32 to vector<16x1xf32>
    %23 = arith.divf %21, %22 : vector<16x1xf32>
    %24 = vector.broadcast %23 : vector<16x1xf32> to vector<16x32xf32>
    %25 = arith.subf %0, %24 : vector<16x32xf32>
    %26 = arith.mulf %25, %25 : vector<16x32xf32>
    %cst_19 = arith.constant dense<0.000000e+00> : vector<16xf32>
    %27 = vector.multi_reduction <add>, %26, %cst_19 [1] : vector<16x32xf32> to vector<16xf32>
    %28 = vector.shape_cast %27 : vector<16xf32> to vector<16x1xf32>
    %cst_20 = arith.constant 3.200000e+01 : f32
    %29 = vector.broadcast %cst_20 : f32 to vector<16x1xf32>
    %30 = arith.divf %28, %29 : vector<16x1xf32>
    %31 = vector.broadcast %23 : vector<16x1xf32> to vector<16x32xf32>
    %32 = arith.subf %0, %31 : vector<16x32xf32>
    %cst_21 = arith.constant 9.99999974E-6 : f32
    %33 = vector.broadcast %cst_21 : f32 to vector<16x1xf32>
    %34 = arith.addf %30, %33 : vector<16x1xf32>
    %35 = math.rsqrt %34 : vector<16x1xf32>
    %36 = vector.broadcast %35 : vector<16x1xf32> to vector<16x32xf32>
    %37 = arith.mulf %32, %36 : vector<16x32xf32>
    %38 = vector.broadcast %4 : vector<1x32xf32> to vector<16x32xf32>
    %39 = arith.mulf %37, %38 : vector<16x32xf32>
    %40 = vector.broadcast %5 : vector<1x32xf32> to vector<16x32xf32>
    %41 = arith.addf %39, %40 : vector<16x32xf32>
    %42 = arith.truncf %41 : vector<16x32xf32> to vector<16x32xbf16>
    %cst_22 = arith.constant dense<0.000000e+00> : vector<16x96xf32>
    %43 = tpu.matmul %42, %13, %cst_22 {dimension_numbers = #tpu.dot_dimension_numbers<[1], [0], [0], [1], [0, 0, 1, 1], [], []>} : vector<16x32xbf16>, vector<32x96xbf16>, vector<16x96xf32> -> vector<16x96xf32>
    %44 = vector.broadcast %6 : vector<1x96xf32> to vector<16x96xf32>
    %45 = arith.addf %43, %44 : vector<16x96xf32>
    %46 = arith.truncf %45 : vector<16x96xf32> to vector<16x96xbf16>
    %47 = vector.extract_strided_slice %46 {offsets = [0, 0], sizes = [16, 32], strides = [1, 1]} : vector<16x96xbf16> to vector<16x32xbf16>
    %48 = vector.extract_strided_slice %46 {offsets = [0, 32], sizes = [16, 32], strides = [1, 1]} : vector<16x96xbf16> to vector<16x32xbf16>
    %49 = tpu.transpose %48, [1, 0] : vector<16x32xbf16> -> vector<32x16xbf16>
    %50 = vector.extract_strided_slice %46 {offsets = [0, 64], sizes = [16, 32], strides = [1, 1]} : vector<16x96xbf16> to vector<16x32xbf16>
    %51 = vector.extract_strided_slice %47 {offsets = [0, 0], sizes = [16, 8], strides = [1, 1]} : vector<16x32xbf16> to vector<16x8xbf16>
    %52 = vector.extract_strided_slice %49 {offsets = [0, 0], sizes = [8, 16], strides = [1, 1]} : vector<32x16xbf16> to vector<8x16xbf16>
    %53 = vector.extract_strided_slice %50 {offsets = [0, 0], sizes = [16, 8], strides = [1, 1]} : vector<16x32xbf16> to vector<16x8xbf16>
    %cst_23 = arith.constant dense<0.000000e+00> : vector<16x16xf32>
    %54 = tpu.matmul %51, %52, %cst_23 {dimension_numbers = #tpu.dot_dimension_numbers<[1], [0], [0], [1], [0, 0, 1, 1], [], []>} : vector<16x8xbf16>, vector<8x16xbf16>, vector<16x16xf32> -> vector<16x16xf32>
    %55 = arith.addf %54, %1 : vector<16x16xf32>
    %cst_24 = arith.constant dense<0xFF800000> : vector<16xf32>
    %56 = vector.multi_reduction <maximumf>, %55, %cst_24 [1] : vector<16x16xf32> to vector<16xf32>
    %57 = vector.shape_cast %56 : vector<16xf32> to vector<16x1xf32>
    %58 = vector.broadcast %57 : vector<16x1xf32> to vector<16x16xf32>
    %59 = arith.subf %55, %58 : vector<16x16xf32>
    %60 = math.exp %59 : vector<16x16xf32>
    %cst_25 = arith.constant dense<0.000000e+00> : vector<16xf32>
    %61 = vector.multi_reduction <add>, %60, %cst_25 [1] : vector<16x16xf32> to vector<16xf32>
    %62 = vector.shape_cast %61 : vector<16xf32> to vector<16x1xf32>
    %63 = tpu.reciprocal %62 {approx = true} : vector<16x1xf32> -> vector<16x1xf32>
    %64 = vector.broadcast %63 : vector<16x1xf32> to vector<16x16xf32>
    %65 = arith.mulf %60, %64 : vector<16x16xf32>
    %66 = arith.truncf %65 : vector<16x16xf32> to vector<16x16xbf16>
    %cst_26 = arith.constant dense<0.000000e+00> : vector<16x8xf32>
    %67 = tpu.matmul %66, %53, %cst_26 {dimension_numbers = #tpu.dot_dimension_numbers<[1], [0], [0], [1], [0, 0, 1, 1], [], []>} : vector<16x16xbf16>, vector<16x8xbf16>, vector<16x8xf32> -> vector<16x8xf32>
    %68 = vector.extract_strided_slice %47 {offsets = [0, 8], sizes = [16, 8], strides = [1, 1]} : vector<16x32xbf16> to vector<16x8xbf16>
    %69 = vector.extract_strided_slice %49 {offsets = [8, 0], sizes = [8, 16], strides = [1, 1]} : vector<32x16xbf16> to vector<8x16xbf16>
    %70 = vector.extract_strided_slice %50 {offsets = [0, 8], sizes = [16, 8], strides = [1, 1]} : vector<16x32xbf16> to vector<16x8xbf16>
    %cst_27 = arith.constant dense<0.000000e+00> : vector<16x16xf32>
    %71 = tpu.matmul %68, %69, %cst_27 {dimension_numbers = #tpu.dot_dimension_numbers<[1], [0], [0], [1], [0, 0, 1, 1], [], []>} : vector<16x8xbf16>, vector<8x16xbf16>, vector<16x16xf32> -> vector<16x16xf32>
    %72 = arith.addf %71, %1 : vector<16x16xf32>
    %cst_28 = arith.constant dense<0xFF800000> : vector<16xf32>
    %73 = vector.multi_reduction <maximumf>, %72, %cst_28 [1] : vector<16x16xf32> to vector<16xf32>
    %74 = vector.shape_cast %73 : vector<16xf32> to vector<16x1xf32>
    %75 = vector.broadcast %74 : vector<16x1xf32> to vector<16x16xf32>
    %76 = arith.subf %72, %75 : vector<16x16xf32>
    %77 = math.exp %76 : vector<16x16xf32>
    %cst_29 = arith.constant dense<0.000000e+00> : vector<16xf32>
    %78 = vector.multi_reduction <add>, %77, %cst_29 [1] : vector<16x16xf32> to vector<16xf32>
    %79 = vector.shape_cast %78 : vector<16xf32> to vector<16x1xf32>
    %80 = tpu.reciprocal %79 {approx = true} : vector<16x1xf32> -> vector<16x1xf32>
    %81 = vector.broadcast %80 : vector<16x1xf32> to vector<16x16xf32>
    %82 = arith.mulf %77, %81 : vector<16x16xf32>
    %83 = arith.truncf %82 : vector<16x16xf32> to vector<16x16xbf16>
    %cst_30 = arith.constant dense<0.000000e+00> : vector<16x8xf32>
    %84 = tpu.matmul %83, %70, %cst_30 {dimension_numbers = #tpu.dot_dimension_numbers<[1], [0], [0], [1], [0, 0, 1, 1], [], []>} : vector<16x16xbf16>, vector<16x8xbf16>, vector<16x8xf32> -> vector<16x8xf32>
    %85 = vector.extract_strided_slice %47 {offsets = [0, 16], sizes = [16, 8], strides = [1, 1]} : vector<16x32xbf16> to vector<16x8xbf16>
    %86 = vector.extract_strided_slice %49 {offsets = [16, 0], sizes = [8, 16], strides = [1, 1]} : vector<32x16xbf16> to vector<8x16xbf16>
    %87 = vector.extract_strided_slice %50 {offsets = [0, 16], sizes = [16, 8], strides = [1, 1]} : vector<16x32xbf16> to vector<16x8xbf16>
    %cst_31 = arith.constant dense<0.000000e+00> : vector<16x16xf32>
    %88 = tpu.matmul %85, %86, %cst_31 {dimension_numbers = #tpu.dot_dimension_numbers<[1], [0], [0], [1], [0, 0, 1, 1], [], []>} : vector<16x8xbf16>, vector<8x16xbf16>, vector<16x16xf32> -> vector<16x16xf32>
    %89 = arith.addf %88, %1 : vector<16x16xf32>
    %cst_32 = arith.constant dense<0xFF800000> : vector<16xf32>
    %90 = vector.multi_reduction <maximumf>, %89, %cst_32 [1] : vector<16x16xf32> to vector<16xf32>
    %91 = vector.shape_cast %90 : vector<16xf32> to vector<16x1xf32>
    %92 = vector.broadcast %91 : vector<16x1xf32> to vector<16x16xf32>
    %93 = arith.subf %89, %92 : vector<16x16xf32>
    %94 = math.exp %93 : vector<16x16xf32>
    %cst_33 = arith.constant dense<0.000000e+00> : vector<16xf32>
    %95 = vector.multi_reduction <add>, %94, %cst_33 [1] : vector<16x16xf32> to vector<16xf32>
    %96 = vector.shape_cast %95 : vector<16xf32> to vector<16x1xf32>
    %97 = tpu.reciprocal %96 {approx = true} : vector<16x1xf32> -> vector<16x1xf32>
    %98 = vector.broadcast %97 : vector<16x1xf32> to vector<16x16xf32>
    %99 = arith.mulf %94, %98 : vector<16x16xf32>
    %100 = arith.truncf %99 : vector<16x16xf32> to vector<16x16xbf16>
    %cst_34 = arith.constant dense<0.000000e+00> : vector<16x8xf32>
    %101 = tpu.matmul %100, %87, %cst_34 {dimension_numbers = #tpu.dot_dimension_numbers<[1], [0], [0], [1], [0, 0, 1, 1], [], []>} : vector<16x16xbf16>, vector<16x8xbf16>, vector<16x8xf32> -> vector<16x8xf32>
    %102 = vector.extract_strided_slice %47 {offsets = [0, 24], sizes = [16, 8], strides = [1, 1]} : vector<16x32xbf16> to vector<16x8xbf16>
    %103 = vector.extract_strided_slice %49 {offsets = [24, 0], sizes = [8, 16], strides = [1, 1]} : vector<32x16xbf16> to vector<8x16xbf16>
    %104 = vector.extract_strided_slice %50 {offsets = [0, 24], sizes = [16, 8], strides = [1, 1]} : vector<16x32xbf16> to vector<16x8xbf16>
    %cst_35 = arith.constant dense<0.000000e+00> : vector<16x16xf32>
    %105 = tpu.matmul %102, %103, %cst_35 {dimension_numbers = #tpu.dot_dimension_numbers<[1], [0], [0], [1], [0, 0, 1, 1], [], []>} : vector<16x8xbf16>, vector<8x16xbf16>, vector<16x16xf32> -> vector<16x16xf32>
    %106 = arith.addf %105, %1 : vector<16x16xf32>
    %cst_36 = arith.constant dense<0xFF800000> : vector<16xf32>
    %107 = vector.multi_reduction <maximumf>, %106, %cst_36 [1] : vector<16x16xf32> to vector<16xf32>
    %108 = vector.shape_cast %107 : vector<16xf32> to vector<16x1xf32>
    %109 = vector.broadcast %108 : vector<16x1xf32> to vector<16x16xf32>
    %110 = arith.subf %106, %109 : vector<16x16xf32>
    %111 = math.exp %110 : vector<16x16xf32>
    %cst_37 = arith.constant dense<0.000000e+00> : vector<16xf32>
    %112 = vector.multi_reduction <add>, %111, %cst_37 [1] : vector<16x16xf32> to vector<16xf32>
    %113 = vector.shape_cast %112 : vector<16xf32> to vector<16x1xf32>
    %114 = tpu.reciprocal %113 {approx = true} : vector<16x1xf32> -> vector<16x1xf32>
    %115 = vector.broadcast %114 : vector<16x1xf32> to vector<16x16xf32>
    %116 = arith.mulf %111, %115 : vector<16x16xf32>
    %117 = arith.truncf %116 : vector<16x16xf32> to vector<16x16xbf16>
    %cst_38 = arith.constant dense<0.000000e+00> : vector<16x8xf32>
    %118 = tpu.matmul %117, %104, %cst_38 {dimension_numbers = #tpu.dot_dimension_numbers<[1], [0], [0], [1], [0, 0, 1, 1], [], []>} : vector<16x16xbf16>, vector<16x8xbf16>, vector<16x8xf32> -> vector<16x8xf32>
    %119 = tpu.concatenate %67, %84, %101, %118 in 1 : vector<16x8xf32>, vector<16x8xf32>, vector<16x8xf32>, vector<16x8xf32> -> vector<16x32xf32>
    %120 = arith.truncf %119 : vector<16x32xf32> to vector<16x32xbf16>
    %cst_39 = arith.constant dense<0.000000e+00> : vector<16x32xf32>
    %121 = tpu.matmul %120, %15, %cst_39 {dimension_numbers = #tpu.dot_dimension_numbers<[1], [0], [0], [1], [0, 0, 1, 1], [], []>} : vector<16x32xbf16>, vector<32x32xbf16>, vector<16x32xf32> -> vector<16x32xf32>
    %122 = arith.addf %0, %121 : vector<16x32xf32>
    %123 = vector.broadcast %7 : vector<1x32xf32> to vector<16x32xf32>
    %124 = arith.addf %122, %123 : vector<16x32xf32>
    %cst_40 = arith.constant dense<0.000000e+00> : vector<16xf32>
    %125 = vector.multi_reduction <add>, %124, %cst_40 [1] : vector<16x32xf32> to vector<16xf32>
    %126 = vector.shape_cast %125 : vector<16xf32> to vector<16x1xf32>
    %cst_41 = arith.constant 3.200000e+01 : f32
    %127 = vector.broadcast %cst_41 : f32 to vector<16x1xf32>
    %128 = arith.divf %126, %127 : vector<16x1xf32>
    %129 = vector.broadcast %128 : vector<16x1xf32> to vector<16x32xf32>
    %130 = arith.subf %124, %129 : vector<16x32xf32>
    %131 = arith.mulf %130, %130 : vector<16x32xf32>
    %cst_42 = arith.constant dense<0.000000e+00> : vector<16xf32>
    %132 = vector.multi_reduction <add>, %131, %cst_42 [1] : vector<16x32xf32> to vector<16xf32>
    %133 = vector.shape_cast %132 : vector<16xf32> to vector<16x1xf32>
    %cst_43 = arith.constant 3.200000e+01 : f32
    %134 = vector.broadcast %cst_43 : f32 to vector<16x1xf32>
    %135 = arith.divf %133, %134 : vector<16x1xf32>
    %136 = vector.broadcast %128 : vector<16x1xf32> to vector<16x32xf32>
    %137 = arith.subf %124, %136 : vector<16x32xf32>
    %cst_44 = arith.constant 9.99999974E-6 : f32
    %138 = vector.broadcast %cst_44 : f32 to vector<16x1xf32>
    %139 = arith.addf %135, %138 : vector<16x1xf32>
    %140 = math.rsqrt %139 : vector<16x1xf32>
    %141 = vector.broadcast %140 : vector<16x1xf32> to vector<16x32xf32>
    %142 = arith.mulf %137, %141 : vector<16x32xf32>
    %143 = vector.broadcast %8 : vector<1x32xf32> to vector<16x32xf32>
    %144 = arith.mulf %142, %143 : vector<16x32xf32>
    %145 = vector.broadcast %9 : vector<1x32xf32> to vector<16x32xf32>
    %146 = arith.addf %144, %145 : vector<16x32xf32>
    %147 = arith.truncf %146 : vector<16x32xf32> to vector<16x32xbf16>
    %cst_45 = arith.constant dense<0.000000e+00> : vector<16x128xf32>
    %148 = tpu.matmul %147, %17, %cst_45 {dimension_numbers = #tpu.dot_dimension_numbers<[1], [0], [0], [1], [0, 0, 1, 1], [], []>} : vector<16x32xbf16>, vector<32x128xbf16>, vector<16x128xf32> -> vector<16x128xf32>
    %149 = vector.broadcast %10 : vector<1x128xf32> to vector<16x128xf32>
    %150 = arith.addf %148, %149 : vector<16x128xf32>
    %cst_46 = arith.constant 1.702000e+00 : f32
    %151 = vector.broadcast %cst_46 : f32 to vector<16x128xf32>
    %152 = arith.mulf %151, %150 : vector<16x128xf32>
    %153 = arith.negf %152 : vector<16x128xf32>
    %154 = math.exp %153 : vector<16x128xf32>
    %cst_47 = arith.constant 1.000000e+00 : f32
    %155 = vector.broadcast %cst_47 : f32 to vector<16x128xf32>
    %156 = arith.addf %155, %154 : vector<16x128xf32>
    %157 = arith.divf %155, %156 : vector<16x128xf32>
    %158 = arith.mulf %150, %157 : vector<16x128xf32>
    %159 = arith.truncf %158 : vector<16x128xf32> to vector<16x128xbf16>
    %cst_48 = arith.constant dense<0.000000e+00> : vector<16x32xf32>
    %160 = tpu.matmul %159, %19, %cst_48 {dimension_numbers = #tpu.dot_dimension_numbers<[1], [0], [0], [1], [0, 0, 1, 1], [], []>} : vector<16x128xbf16>, vector<128x32xbf16>, vector<16x32xf32> -> vector<16x32xf32>
    %161 = vector.broadcast %11 : vector<1x32xf32> to vector<16x32xf32>
    %162 = arith.addf %160, %161 : vector<16x32xf32>
    %163 = arith.addf %124, %162 : vector<16x32xf32>
    %c1 = arith.constant 1 : index
    %c0_49 = arith.constant 0 : index
    %c0_50 = arith.constant 0 : index
    %164 = vector.load %arg3[%c1, %c0_49, %c0_50] : memref<2x8x128xf32, #tpu.memory_space<vmem>>, vector<1x8x128xf32>
    %165 = vector.shape_cast %164 : vector<1x8x128xf32> to vector<8x128xf32>
    %166 = vector.extract_strided_slice %165 {offsets = [0, 0], sizes = [1, 32], strides = [1, 1]} : vector<8x128xf32> to vector<1x32xf32>
    %167 = vector.extract_strided_slice %165 {offsets = [1, 0], sizes = [1, 32], strides = [1, 1]} : vector<8x128xf32> to vector<1x32xf32>
    %168 = vector.extract_strided_slice %165 {offsets = [2, 0], sizes = [1, 96], strides = [1, 1]} : vector<8x128xf32> to vector<1x96xf32>
    %169 = vector.extract_strided_slice %165 {offsets = [3, 0], sizes = [1, 32], strides = [1, 1]} : vector<8x128xf32> to vector<1x32xf32>
    %170 = vector.extract_strided_slice %165 {offsets = [4, 0], sizes = [1, 32], strides = [1, 1]} : vector<8x128xf32> to vector<1x32xf32>
    %171 = vector.extract_strided_slice %165 {offsets = [5, 0], sizes = [1, 32], strides = [1, 1]} : vector<8x128xf32> to vector<1x32xf32>
    %172 = vector.extract_strided_slice %165 {offsets = [6, 0], sizes = [1, 128], strides = [1, 1]} : vector<8x128xf32> to vector<1x128xf32>
    %173 = vector.extract_strided_slice %165 {offsets = [7, 0], sizes = [1, 32], strides = [1, 1]} : vector<8x128xf32> to vector<1x32xf32>
    %c1_51 = arith.constant 1 : index
    %c0_52 = arith.constant 0 : index
    %c0_53 = arith.constant 0 : index
    %174 = vector.load %arg4[%c1_51, %c0_52, %c0_53] : memref<2x32x96xbf16, #tpu.memory_space<vmem>>, vector<1x32x96xbf16>
    %175 = vector.shape_cast %174 : vector<1x32x96xbf16> to vector<32x96xbf16>
    %c1_54 = arith.constant 1 : index
    %c0_55 = arith.constant 0 : index
    %c0_56 = arith.constant 0 : index
    %176 = vector.load %arg5[%c1_54, %c0_55, %c0_56] : memref<2x32x32xbf16, #tpu.memory_space<vmem>>, vector<1x32x32xbf16>
    %177 = vector.shape_cast %176 : vector<1x32x32xbf16> to vector<32x32xbf16>
    %c1_57 = arith.constant 1 : index
    %c0_58 = arith.constant 0 : index
    %c0_59 = arith.constant 0 : index
    %178 = vector.load %arg6[%c1_57, %c0_58, %c0_59] : memref<2x32x128xbf16, #tpu.memory_space<vmem>>, vector<1x32x128xbf16>
    %179 = vector.shape_cast %178 : vector<1x32x128xbf16> to vector<32x128xbf16>
    %c1_60 = arith.constant 1 : index
    %c0_61 = arith.constant 0 : index
    %c0_62 = arith.constant 0 : index
    %180 = vector.load %arg7[%c1_60, %c0_61, %c0_62] : memref<2x128x32xbf16, #tpu.memory_space<vmem>>, vector<1x128x32xbf16>
    %181 = vector.shape_cast %180 : vector<1x128x32xbf16> to vector<128x32xbf16>
    %cst_63 = arith.constant dense<0.000000e+00> : vector<16xf32>
    %182 = vector.multi_reduction <add>, %163, %cst_63 [1] : vector<16x32xf32> to vector<16xf32>
    %183 = vector.shape_cast %182 : vector<16xf32> to vector<16x1xf32>
    %cst_64 = arith.constant 3.200000e+01 : f32
    %184 = vector.broadcast %cst_64 : f32 to vector<16x1xf32>
    %185 = arith.divf %183, %184 : vector<16x1xf32>
    %186 = vector.broadcast %185 : vector<16x1xf32> to vector<16x32xf32>
    %187 = arith.subf %163, %186 : vector<16x32xf32>
    %188 = arith.mulf %187, %187 : vector<16x32xf32>
    %cst_65 = arith.constant dense<0.000000e+00> : vector<16xf32>
    %189 = vector.multi_reduction <add>, %188, %cst_65 [1] : vector<16x32xf32> to vector<16xf32>
    %190 = vector.shape_cast %189 : vector<16xf32> to vector<16x1xf32>
    %cst_66 = arith.constant 3.200000e+01 : f32
    %191 = vector.broadcast %cst_66 : f32 to vector<16x1xf32>
    %192 = arith.divf %190, %191 : vector<16x1xf32>
    %193 = vector.broadcast %185 : vector<16x1xf32> to vector<16x32xf32>
    %194 = arith.subf %163, %193 : vector<16x32xf32>
    %cst_67 = arith.constant 9.99999974E-6 : f32
    %195 = vector.broadcast %cst_67 : f32 to vector<16x1xf32>
    %196 = arith.addf %192, %195 : vector<16x1xf32>
    %197 = math.rsqrt %196 : vector<16x1xf32>
    %198 = vector.broadcast %197 : vector<16x1xf32> to vector<16x32xf32>
    %199 = arith.mulf %194, %198 : vector<16x32xf32>
    %200 = vector.broadcast %166 : vector<1x32xf32> to vector<16x32xf32>
    %201 = arith.mulf %199, %200 : vector<16x32xf32>
    %202 = vector.broadcast %167 : vector<1x32xf32> to vector<16x32xf32>
    %203 = arith.addf %201, %202 : vector<16x32xf32>
    %204 = arith.truncf %203 : vector<16x32xf32> to vector<16x32xbf16>
    %cst_68 = arith.constant dense<0.000000e+00> : vector<16x96xf32>
    %205 = tpu.matmul %204, %175, %cst_68 {dimension_numbers = #tpu.dot_dimension_numbers<[1], [0], [0], [1], [0, 0, 1, 1], [], []>} : vector<16x32xbf16>, vector<32x96xbf16>, vector<16x96xf32> -> vector<16x96xf32>
    %206 = vector.broadcast %168 : vector<1x96xf32> to vector<16x96xf32>
    %207 = arith.addf %205, %206 : vector<16x96xf32>
    %208 = arith.truncf %207 : vector<16x96xf32> to vector<16x96xbf16>
    %209 = vector.extract_strided_slice %208 {offsets = [0, 0], sizes = [16, 32], strides = [1, 1]} : vector<16x96xbf16> to vector<16x32xbf16>
    %210 = vector.extract_strided_slice %208 {offsets = [0, 32], sizes = [16, 32], strides = [1, 1]} : vector<16x96xbf16> to vector<16x32xbf16>
    %211 = tpu.transpose %210, [1, 0] : vector<16x32xbf16> -> vector<32x16xbf16>
    %212 = vector.extract_strided_slice %208 {offsets = [0, 64], sizes = [16, 32], strides = [1, 1]} : vector<16x96xbf16> to vector<16x32xbf16>
    %213 = vector.extract_strided_slice %209 {offsets = [0, 0], sizes = [16, 8], strides = [1, 1]} : vector<16x32xbf16> to vector<16x8xbf16>
    %214 = vector.extract_strided_slice %211 {offsets = [0, 0], sizes = [8, 16], strides = [1, 1]} : vector<32x16xbf16> to vector<8x16xbf16>
    %215 = vector.extract_strided_slice %212 {offsets = [0, 0], sizes = [16, 8], strides = [1, 1]} : vector<16x32xbf16> to vector<16x8xbf16>
    %cst_69 = arith.constant dense<0.000000e+00> : vector<16x16xf32>
    %216 = tpu.matmul %213, %214, %cst_69 {dimension_numbers = #tpu.dot_dimension_numbers<[1], [0], [0], [1], [0, 0, 1, 1], [], []>} : vector<16x8xbf16>, vector<8x16xbf16>, vector<16x16xf32> -> vector<16x16xf32>
    %217 = arith.addf %216, %1 : vector<16x16xf32>
    %cst_70 = arith.constant dense<0xFF800000> : vector<16xf32>
    %218 = vector.multi_reduction <maximumf>, %217, %cst_70 [1] : vector<16x16xf32> to vector<16xf32>
    %219 = vector.shape_cast %218 : vector<16xf32> to vector<16x1xf32>
    %220 = vector.broadcast %219 : vector<16x1xf32> to vector<16x16xf32>
    %221 = arith.subf %217, %220 : vector<16x16xf32>
    %222 = math.exp %221 : vector<16x16xf32>
    %cst_71 = arith.constant dense<0.000000e+00> : vector<16xf32>
    %223 = vector.multi_reduction <add>, %222, %cst_71 [1] : vector<16x16xf32> to vector<16xf32>
    %224 = vector.shape_cast %223 : vector<16xf32> to vector<16x1xf32>
    %225 = tpu.reciprocal %224 {approx = true} : vector<16x1xf32> -> vector<16x1xf32>
    %226 = vector.broadcast %225 : vector<16x1xf32> to vector<16x16xf32>
    %227 = arith.mulf %222, %226 : vector<16x16xf32>
    %228 = arith.truncf %227 : vector<16x16xf32> to vector<16x16xbf16>
    %cst_72 = arith.constant dense<0.000000e+00> : vector<16x8xf32>
    %229 = tpu.matmul %228, %215, %cst_72 {dimension_numbers = #tpu.dot_dimension_numbers<[1], [0], [0], [1], [0, 0, 1, 1], [], []>} : vector<16x16xbf16>, vector<16x8xbf16>, vector<16x8xf32> -> vector<16x8xf32>
    %230 = vector.extract_strided_slice %209 {offsets = [0, 8], sizes = [16, 8], strides = [1, 1]} : vector<16x32xbf16> to vector<16x8xbf16>
    %231 = vector.extract_strided_slice %211 {offsets = [8, 0], sizes = [8, 16], strides = [1, 1]} : vector<32x16xbf16> to vector<8x16xbf16>
    %232 = vector.extract_strided_slice %212 {offsets = [0, 8], sizes = [16, 8], strides = [1, 1]} : vector<16x32xbf16> to vector<16x8xbf16>
    %cst_73 = arith.constant dense<0.000000e+00> : vector<16x16xf32>
    %233 = tpu.matmul %230, %231, %cst_73 {dimension_numbers = #tpu.dot_dimension_numbers<[1], [0], [0], [1], [0, 0, 1, 1], [], []>} : vector<16x8xbf16>, vector<8x16xbf16>, vector<16x16xf32> -> vector<16x16xf32>
    %234 = arith.addf %233, %1 : vector<16x16xf32>
    %cst_74 = arith.constant dense<0xFF800000> : vector<16xf32>
    %235 = vector.multi_reduction <maximumf>, %234, %cst_74 [1] : vector<16x16xf32> to vector<16xf32>
    %236 = vector.shape_cast %235 : vector<16xf32> to vector<16x1xf32>
    %237 = vector.broadcast %236 : vector<16x1xf32> to vector<16x16xf32>
    %238 = arith.subf %234, %237 : vector<16x16xf32>
    %239 = math.exp %238 : vector<16x16xf32>
    %cst_75 = arith.constant dense<0.000000e+00> : vector<16xf32>
    %240 = vector.multi_reduction <add>, %239, %cst_75 [1] : vector<16x16xf32> to vector<16xf32>
    %241 = vector.shape_cast %240 : vector<16xf32> to vector<16x1xf32>
    %242 = tpu.reciprocal %241 {approx = true} : vector<16x1xf32> -> vector<16x1xf32>
    %243 = vector.broadcast %242 : vector<16x1xf32> to vector<16x16xf32>
    %244 = arith.mulf %239, %243 : vector<16x16xf32>
    %245 = arith.truncf %244 : vector<16x16xf32> to vector<16x16xbf16>
    %cst_76 = arith.constant dense<0.000000e+00> : vector<16x8xf32>
    %246 = tpu.matmul %245, %232, %cst_76 {dimension_numbers = #tpu.dot_dimension_numbers<[1], [0], [0], [1], [0, 0, 1, 1], [], []>} : vector<16x16xbf16>, vector<16x8xbf16>, vector<16x8xf32> -> vector<16x8xf32>
    %247 = vector.extract_strided_slice %209 {offsets = [0, 16], sizes = [16, 8], strides = [1, 1]} : vector<16x32xbf16> to vector<16x8xbf16>
    %248 = vector.extract_strided_slice %211 {offsets = [16, 0], sizes = [8, 16], strides = [1, 1]} : vector<32x16xbf16> to vector<8x16xbf16>
    %249 = vector.extract_strided_slice %212 {offsets = [0, 16], sizes = [16, 8], strides = [1, 1]} : vector<16x32xbf16> to vector<16x8xbf16>
    %cst_77 = arith.constant dense<0.000000e+00> : vector<16x16xf32>
    %250 = tpu.matmul %247, %248, %cst_77 {dimension_numbers = #tpu.dot_dimension_numbers<[1], [0], [0], [1], [0, 0, 1, 1], [], []>} : vector<16x8xbf16>, vector<8x16xbf16>, vector<16x16xf32> -> vector<16x16xf32>
    %251 = arith.addf %250, %1 : vector<16x16xf32>
    %cst_78 = arith.constant dense<0xFF800000> : vector<16xf32>
    %252 = vector.multi_reduction <maximumf>, %251, %cst_78 [1] : vector<16x16xf32> to vector<16xf32>
    %253 = vector.shape_cast %252 : vector<16xf32> to vector<16x1xf32>
    %254 = vector.broadcast %253 : vector<16x1xf32> to vector<16x16xf32>
    %255 = arith.subf %251, %254 : vector<16x16xf32>
    %256 = math.exp %255 : vector<16x16xf32>
    %cst_79 = arith.constant dense<0.000000e+00> : vector<16xf32>
    %257 = vector.multi_reduction <add>, %256, %cst_79 [1] : vector<16x16xf32> to vector<16xf32>
    %258 = vector.shape_cast %257 : vector<16xf32> to vector<16x1xf32>
    %259 = tpu.reciprocal %258 {approx = true} : vector<16x1xf32> -> vector<16x1xf32>
    %260 = vector.broadcast %259 : vector<16x1xf32> to vector<16x16xf32>
    %261 = arith.mulf %256, %260 : vector<16x16xf32>
    %262 = arith.truncf %261 : vector<16x16xf32> to vector<16x16xbf16>
    %cst_80 = arith.constant dense<0.000000e+00> : vector<16x8xf32>
    %263 = tpu.matmul %262, %249, %cst_80 {dimension_numbers = #tpu.dot_dimension_numbers<[1], [0], [0], [1], [0, 0, 1, 1], [], []>} : vector<16x16xbf16>, vector<16x8xbf16>, vector<16x8xf32> -> vector<16x8xf32>
    %264 = vector.extract_strided_slice %209 {offsets = [0, 24], sizes = [16, 8], strides = [1, 1]} : vector<16x32xbf16> to vector<16x8xbf16>
    %265 = vector.extract_strided_slice %211 {offsets = [24, 0], sizes = [8, 16], strides = [1, 1]} : vector<32x16xbf16> to vector<8x16xbf16>
    %266 = vector.extract_strided_slice %212 {offsets = [0, 24], sizes = [16, 8], strides = [1, 1]} : vector<16x32xbf16> to vector<16x8xbf16>
    %cst_81 = arith.constant dense<0.000000e+00> : vector<16x16xf32>
    %267 = tpu.matmul %264, %265, %cst_81 {dimension_numbers = #tpu.dot_dimension_numbers<[1], [0], [0], [1], [0, 0, 1, 1], [], []>} : vector<16x8xbf16>, vector<8x16xbf16>, vector<16x16xf32> -> vector<16x16xf32>
    %268 = arith.addf %267, %1 : vector<16x16xf32>
    %cst_82 = arith.constant dense<0xFF800000> : vector<16xf32>
    %269 = vector.multi_reduction <maximumf>, %268, %cst_82 [1] : vector<16x16xf32> to vector<16xf32>
    %270 = vector.shape_cast %269 : vector<16xf32> to vector<16x1xf32>
    %271 = vector.broadcast %270 : vector<16x1xf32> to vector<16x16xf32>
    %272 = arith.subf %268, %271 : vector<16x16xf32>
    %273 = math.exp %272 : vector<16x16xf32>
    %cst_83 = arith.constant dense<0.000000e+00> : vector<16xf32>
    %274 = vector.multi_reduction <add>, %273, %cst_83 [1] : vector<16x16xf32> to vector<16xf32>
    %275 = vector.shape_cast %274 : vector<16xf32> to vector<16x1xf32>
    %276 = tpu.reciprocal %275 {approx = true} : vector<16x1xf32> -> vector<16x1xf32>
    %277 = vector.broadcast %276 : vector<16x1xf32> to vector<16x16xf32>
    %278 = arith.mulf %273, %277 : vector<16x16xf32>
    %279 = arith.truncf %278 : vector<16x16xf32> to vector<16x16xbf16>
    %cst_84 = arith.constant dense<0.000000e+00> : vector<16x8xf32>
    %280 = tpu.matmul %279, %266, %cst_84 {dimension_numbers = #tpu.dot_dimension_numbers<[1], [0], [0], [1], [0, 0, 1, 1], [], []>} : vector<16x16xbf16>, vector<16x8xbf16>, vector<16x8xf32> -> vector<16x8xf32>
    %281 = tpu.concatenate %229, %246, %263, %280 in 1 : vector<16x8xf32>, vector<16x8xf32>, vector<16x8xf32>, vector<16x8xf32> -> vector<16x32xf32>
    %282 = arith.truncf %281 : vector<16x32xf32> to vector<16x32xbf16>
    %cst_85 = arith.constant dense<0.000000e+00> : vector<16x32xf32>
    %283 = tpu.matmul %282, %177, %cst_85 {dimension_numbers = #tpu.dot_dimension_numbers<[1], [0], [0], [1], [0, 0, 1, 1], [], []>} : vector<16x32xbf16>, vector<32x32xbf16>, vector<16x32xf32> -> vector<16x32xf32>
    %284 = arith.addf %163, %283 : vector<16x32xf32>
    %285 = vector.broadcast %169 : vector<1x32xf32> to vector<16x32xf32>
    %286 = arith.addf %284, %285 : vector<16x32xf32>
    %cst_86 = arith.constant dense<0.000000e+00> : vector<16xf32>
    %287 = vector.multi_reduction <add>, %286, %cst_86 [1] : vector<16x32xf32> to vector<16xf32>
    %288 = vector.shape_cast %287 : vector<16xf32> to vector<16x1xf32>
    %cst_87 = arith.constant 3.200000e+01 : f32
    %289 = vector.broadcast %cst_87 : f32 to vector<16x1xf32>
    %290 = arith.divf %288, %289 : vector<16x1xf32>
    %291 = vector.broadcast %290 : vector<16x1xf32> to vector<16x32xf32>
    %292 = arith.subf %286, %291 : vector<16x32xf32>
    %293 = arith.mulf %292, %292 : vector<16x32xf32>
    %cst_88 = arith.constant dense<0.000000e+00> : vector<16xf32>
    %294 = vector.multi_reduction <add>, %293, %cst_88 [1] : vector<16x32xf32> to vector<16xf32>
    %295 = vector.shape_cast %294 : vector<16xf32> to vector<16x1xf32>
    %cst_89 = arith.constant 3.200000e+01 : f32
    %296 = vector.broadcast %cst_89 : f32 to vector<16x1xf32>
    %297 = arith.divf %295, %296 : vector<16x1xf32>
    %298 = vector.broadcast %290 : vector<16x1xf32> to vector<16x32xf32>
    %299 = arith.subf %286, %298 : vector<16x32xf32>
    %cst_90 = arith.constant 9.99999974E-6 : f32
    %300 = vector.broadcast %cst_90 : f32 to vector<16x1xf32>
    %301 = arith.addf %297, %300 : vector<16x1xf32>
    %302 = math.rsqrt %301 : vector<16x1xf32>
    %303 = vector.broadcast %302 : vector<16x1xf32> to vector<16x32xf32>
    %304 = arith.mulf %299, %303 : vector<16x32xf32>
    %305 = vector.broadcast %170 : vector<1x32xf32> to vector<16x32xf32>
    %306 = arith.mulf %304, %305 : vector<16x32xf32>
    %307 = vector.broadcast %171 : vector<1x32xf32> to vector<16x32xf32>
    %308 = arith.addf %306, %307 : vector<16x32xf32>
    %309 = arith.truncf %308 : vector<16x32xf32> to vector<16x32xbf16>
    %cst_91 = arith.constant dense<0.000000e+00> : vector<16x128xf32>
    %310 = tpu.matmul %309, %179, %cst_91 {dimension_numbers = #tpu.dot_dimension_numbers<[1], [0], [0], [1], [0, 0, 1, 1], [], []>} : vector<16x32xbf16>, vector<32x128xbf16>, vector<16x128xf32> -> vector<16x128xf32>
    %311 = vector.broadcast %172 : vector<1x128xf32> to vector<16x128xf32>
    %312 = arith.addf %310, %311 : vector<16x128xf32>
    %cst_92 = arith.constant 1.702000e+00 : f32
    %313 = vector.broadcast %cst_92 : f32 to vector<16x128xf32>
    %314 = arith.mulf %313, %312 : vector<16x128xf32>
    %315 = arith.negf %314 : vector<16x128xf32>
    %316 = math.exp %315 : vector<16x128xf32>
    %cst_93 = arith.constant 1.000000e+00 : f32
    %317 = vector.broadcast %cst_93 : f32 to vector<16x128xf32>
    %318 = arith.addf %317, %316 : vector<16x128xf32>
    %319 = arith.divf %317, %318 : vector<16x128xf32>
    %320 = arith.mulf %312, %319 : vector<16x128xf32>
    %321 = arith.truncf %320 : vector<16x128xf32> to vector<16x128xbf16>
    %cst_94 = arith.constant dense<0.000000e+00> : vector<16x32xf32>
    %322 = tpu.matmul %321, %181, %cst_94 {dimension_numbers = #tpu.dot_dimension_numbers<[1], [0], [0], [1], [0, 0, 1, 1], [], []>} : vector<16x128xbf16>, vector<128x32xbf16>, vector<16x32xf32> -> vector<16x32xf32>
    %323 = vector.broadcast %173 : vector<1x32xf32> to vector<16x32xf32>
    %324 = arith.addf %322, %323 : vector<16x32xf32>
    %325 = arith.addf %286, %324 : vector<16x32xf32>
    %c0_95 = arith.constant 0 : index
    %c0_96 = arith.constant 0 : index
    %326 = vector.load %arg8[%c0_95, %c0_96] : memref<8x128xf32, #tpu.memory_space<vmem>>, vector<8x128xf32>
    %327 = vector.extract_strided_slice %326 {offsets = [0, 0], sizes = [1, 32], strides = [1, 1]} : vector<8x128xf32> to vector<1x32xf32>
    %328 = vector.extract_strided_slice %326 {offsets = [1, 0], sizes = [1, 32], strides = [1, 1]} : vector<8x128xf32> to vector<1x32xf32>
    %329 = vector.extract_strided_slice %326 {offsets = [2, 0], sizes = [1, 128], strides = [1, 1]} : vector<8x128xf32> to vector<1x128xf32>
    %cst_97 = arith.constant dense<0.000000e+00> : vector<16xf32>
    %330 = vector.multi_reduction <add>, %325, %cst_97 [1] : vector<16x32xf32> to vector<16xf32>
    %331 = vector.shape_cast %330 : vector<16xf32> to vector<16x1xf32>
    %cst_98 = arith.constant 3.200000e+01 : f32
    %332 = vector.broadcast %cst_98 : f32 to vector<16x1xf32>
    %333 = arith.divf %331, %332 : vector<16x1xf32>
    %334 = vector.broadcast %333 : vector<16x1xf32> to vector<16x32xf32>
    %335 = arith.subf %325, %334 : vector<16x32xf32>
    %336 = arith.mulf %335, %335 : vector<16x32xf32>
    %cst_99 = arith.constant dense<0.000000e+00> : vector<16xf32>
    %337 = vector.multi_reduction <add>, %336, %cst_99 [1] : vector<16x32xf32> to vector<16xf32>
    %338 = vector.shape_cast %337 : vector<16xf32> to vector<16x1xf32>
    %cst_100 = arith.constant 3.200000e+01 : f32
    %339 = vector.broadcast %cst_100 : f32 to vector<16x1xf32>
    %340 = arith.divf %338, %339 : vector<16x1xf32>
    %341 = vector.broadcast %333 : vector<16x1xf32> to vector<16x32xf32>
    %342 = arith.subf %325, %341 : vector<16x32xf32>
    %cst_101 = arith.constant 9.99999974E-6 : f32
    %343 = vector.broadcast %cst_101 : f32 to vector<16x1xf32>
    %344 = arith.addf %340, %343 : vector<16x1xf32>
    %345 = math.rsqrt %344 : vector<16x1xf32>
    %346 = vector.broadcast %345 : vector<16x1xf32> to vector<16x32xf32>
    %347 = arith.mulf %342, %346 : vector<16x32xf32>
    %348 = vector.broadcast %327 : vector<1x32xf32> to vector<16x32xf32>
    %349 = arith.mulf %347, %348 : vector<16x32xf32>
    %350 = vector.broadcast %328 : vector<1x32xf32> to vector<16x32xf32>
    %351 = arith.addf %349, %350 : vector<16x32xf32>
    %352 = arith.truncf %351 : vector<16x32xf32> to vector<16x32xbf16>
    %c0_102 = arith.constant 0 : index
    %c0_103 = arith.constant 0 : index
    %353 = vector.load %arg9[%c0_102, %c0_103] : memref<32x128xbf16, #tpu.memory_space<vmem>>, vector<32x128xbf16>
    %cst_104 = arith.constant dense<0.000000e+00> : vector<16x128xf32>
    %354 = tpu.matmul %352, %353, %cst_104 {dimension_numbers = #tpu.dot_dimension_numbers<[1], [0], [0], [1], [0, 0, 1, 1], [], []>} : vector<16x32xbf16>, vector<32x128xbf16>, vector<16x128xf32> -> vector<16x128xf32>
    %355 = arith.truncf %0 : vector<16x32xf32> to vector<16x32xbf16>
    %c0_105 = arith.constant 0 : index
    %c0_106 = arith.constant 0 : index
    %356 = vector.load %arg10[%c0_105, %c0_106] : memref<32x128xbf16, #tpu.memory_space<vmem>>, vector<32x128xbf16>
    %cst_107 = arith.constant dense<0.000000e+00> : vector<16x128xf32>
    %357 = tpu.matmul %355, %356, %cst_107 {dimension_numbers = #tpu.dot_dimension_numbers<[1], [0], [0], [1], [0, 0, 1, 1], [], []>} : vector<16x32xbf16>, vector<32x128xbf16>, vector<16x128xf32> -> vector<16x128xf32>
    %358 = arith.addf %354, %357 : vector<16x128xf32>
    %359 = vector.broadcast %329 : vector<1x128xf32> to vector<16x128xf32>
    %360 = arith.addf %358, %359 : vector<16x128xf32>
    %c0_108 = arith.constant 0 : index
    %c0_109 = arith.constant 0 : index
    %361 = vector.load %arg11[%c0_108, %c0_109] : memref<16x128xf32, #tpu.memory_space<vmem>>, vector<16x128xf32>
    tpu.vector_store %arg11[%c0_108, %c0_109], %360 {strides = array<i32>} : memref<16x128xf32, #tpu.memory_space<vmem>>, vector<16x128xf32>,
    return
  }
  func.func @transform_0(%arg0: i32) -> (i32, i32) {
    %c0_i32 = arith.constant 0 : i32
    %c0_i32_0 = arith.constant 0 : i32
    %c0_i32_1 = arith.constant 0 : i32
    return %c0_i32, %c0_i32_0 : i32, i32
  }
  func.func @transform_1(%arg0: i32) -> (i32, i32) {
    %c0_i32 = arith.constant 0 : i32
    %c0_i32_0 = arith.constant 0 : i32
    %c0_i32_1 = arith.constant 0 : i32
    return %c0_i32, %c0_i32_0 : i32, i32
  }
  func.func @transform_2(%arg0: i32) -> (i32, i32, i32) {
    %c0_i32 = arith.constant 0 : i32
    %c0_i32_0 = arith.constant 0 : i32
    %c0_i32_1 = arith.constant 0 : i32
    %c0_i32_2 = arith.constant 0 : i32
    return %c0_i32, %c0_i32_0, %c0_i32_1 : i32, i32, i32
  }
  func.func @transform_3(%arg0: i32) -> (i32, i32, i32) {
    %c0_i32 = arith.constant 0 : i32
    %c0_i32_0 = arith.constant 0 : i32
    %c0_i32_1 = arith.constant 0 : i32
    %c0_i32_2 = arith.constant 0 : i32
    return %c0_i32, %c0_i32_0, %c0_i32_1 : i32, i32, i32
  }
  func.func @transform_4(%arg0: i32) -> (i32, i32, i32) {
    %c0_i32 = arith.constant 0 : i32
    %c0_i32_0 = arith.constant 0 : i32
    %c0_i32_1 = arith.constant 0 : i32
    %c0_i32_2 = arith.constant 0 : i32
    return %c0_i32, %c0_i32_0, %c0_i32_1 : i32, i32, i32
  }
  func.func @transform_5(%arg0: i32) -> (i32, i32, i32) {
    %c0_i32 = arith.constant 0 : i32
    %c0_i32_0 = arith.constant 0 : i32
    %c0_i32_1 = arith.constant 0 : i32
    %c0_i32_2 = arith.constant 0 : i32
    return %c0_i32, %c0_i32_0, %c0_i32_1 : i32, i32, i32
  }
  func.func @transform_6(%arg0: i32) -> (i32, i32, i32) {
    %c0_i32 = arith.constant 0 : i32
    %c0_i32_0 = arith.constant 0 : i32
    %c0_i32_1 = arith.constant 0 : i32
    %c0_i32_2 = arith.constant 0 : i32
    return %c0_i32, %c0_i32_0, %c0_i32_1 : i32, i32, i32
  }
  func.func @transform_7(%arg0: i32) -> (i32, i32) {
    %c0_i32 = arith.constant 0 : i32
    %c0_i32_0 = arith.constant 0 : i32
    %c0_i32_1 = arith.constant 0 : i32
    return %c0_i32, %c0_i32_0 : i32, i32
  }
  func.func @transform_8(%arg0: i32) -> (i32, i32) {
    %c0_i32 = arith.constant 0 : i32
    %c0_i32_0 = arith.constant 0 : i32
    %c0_i32_1 = arith.constant 0 : i32
    return %c0_i32, %c0_i32_0 : i32, i32
  }
  func.func @transform_9(%arg0: i32) -> (i32, i32) {
    %c0_i32 = arith.constant 0 : i32
    %c0_i32_0 = arith.constant 0 : i32
    %c0_i32_1 = arith.constant 0 : i32
    return %c0_i32, %c0_i32_0 : i32, i32
  }
  func.func @transform_10(%arg0: i32) -> (i32, i32) {
    %c0_i32 = arith.constant 0 : i32
    %c0_i32_0 = arith.constant 0 : i32
    %c0_i32_1 = arith.constant 0 : i32
    return %c0_i32, %c0_i32_0 : i32, i32
  }
}

</mosaic_0001>

<llo_original>
// kernel: text_encoder_forward.1
$region0: #{text_encoder_forward.1}
  #allocation0 [shape = 'u32[]', space=smem, size = 0x4, offset = 0x4, fixed_abs, tag = 'smem constant byte address 0x4 - core index']
  #allocation1 [shape = 'u32[144,128]{1,0:T(1,128)}', space=vmem, size = 0x12000, scoped, tag = 'internal scratch']
  %s0 = inlined_call_operand.vmem [shape: f32[16,32], index: 0, kind: input, shape index: {}]
  %s1 = inlined_call_operand.vmem [shape: f32[16,16], index: 1, kind: input, shape index: {}]
  %s2 = inlined_call_operand.vmem [shape: f32[2,8,128], index: 2, kind: input, shape index: {}]
  %s3 = inlined_call_operand.vmem [shape: bf16[2,32,96], index: 3, kind: input, shape index: {}]
  %s4 = inlined_call_operand.vmem [shape: bf16[2,32,32], index: 4, kind: input, shape index: {}]
  %s5 = inlined_call_operand.vmem [shape: bf16[2,32,128], index: 5, kind: input, shape index: {}]
  %s6 = inlined_call_operand.vmem [shape: bf16[2,128,32], index: 6, kind: input, shape index: {}]
  %s7 = inlined_call_operand.vmem [shape: f32[8,128], index: 7, kind: input, shape index: {}]
  %s8 = inlined_call_operand.vmem [shape: bf16[32,128], index: 8, kind: input, shape index: {}]
  %s9 = inlined_call_operand.vmem [shape: bf16[32,128], index: 9, kind: input, shape index: {}]
  %s10 = inlined_call_operand.vmem [shape: f32[16,128], index: 10, kind: output, shape index: {}]
  %s11 = sld [smem:[#allocation0]]
  $region50: #{text_encoder_forward.1} parent=0
    _
  %s13 = ssub.s32 1, %s11
  %s14 = scalar_select 0, %s13, %s11
  // Predicated region
  $region2: #{text_encoder_forward.1} parent=0 // pred_check
    _
  $region3: #{text_encoder_forward.1} parent=0 // pred_check_branch
    %16 = sbr.rel (0) target = $region5
  $region4: #{text_encoder_forward.1} parent=0 // pred_region
    _
  $region5: #{text_encoder_forward.1} parent=0 // pred_fallthru
    _
  // Predicated region
  $region6: #{text_encoder_forward.1} parent=0 // pred_check
    _
  $region7: #{text_encoder_forward.1} parent=0 // pred_check_branch
    %18 = sbr.rel (0) target = $region9
  $region8: #{text_encoder_forward.1} parent=0 // pred_region
    _
  $region9: #{text_encoder_forward.1} parent=0 // pred_fallthru
    _
  // Predicated region
  $region10: #{text_encoder_forward.1} parent=0 // pred_check
    _
  $region11: #{text_encoder_forward.1} parent=0 // pred_check_branch
    %20 = sbr.rel (0) target = $region13
  $region12: #{text_encoder_forward.1} parent=0 // pred_region
    _
  $region13: #{text_encoder_forward.1} parent=0 // pred_fallthru
    _
  // Predicated region
  $region14: #{text_encoder_forward.1} parent=0 // pred_check
    _
  $region15: #{text_encoder_forward.1} parent=0 // pred_check_branch
    %22 = sbr.rel (0) target = $region17
  $region16: #{text_encoder_forward.1} parent=0 // pred_region
    _
  $region17: #{text_encoder_forward.1} parent=0 // pred_fallthru
    _
  // Predicated region
  $region18: #{text_encoder_forward.1} parent=0 // pred_check
    _
  $region19: #{text_encoder_forward.1} parent=0 // pred_check_branch
    %24 = sbr.rel (0) target = $region21
  $region20: #{text_encoder_forward.1} parent=0 // pred_region
    _
  $region21: #{text_encoder_forward.1} parent=0 // pred_fallthru
    _
  // Predicated region
  $region22: #{text_encoder_forward.1} parent=0 // pred_check
    _
  $region23: #{text_encoder_forward.1} parent=0 // pred_check_branch
    %26 = sbr.rel (0) target = $region25
  $region24: #{text_encoder_forward.1} parent=0 // pred_region
    _
  $region25: #{text_encoder_forward.1} parent=0 // pred_fallthru
    _
  // Predicated region
  $region26: #{text_encoder_forward.1} parent=0 // pred_check
    _
  $region27: #{text_encoder_forward.1} parent=0 // pred_check_branch
    %28 = sbr.rel (0) target = $region29
  $region28: #{text_encoder_forward.1} parent=0 // pred_region
    _
  $region29: #{text_encoder_forward.1} parent=0 // pred_fallthru
    _
  // Predicated region
  $region30: #{text_encoder_forward.1} parent=0 // pred_check
    _
  $region31: #{text_encoder_forward.1} parent=0 // pred_check_branch
    %30 = sbr.rel (0) target = $region33
  $region32: #{text_encoder_forward.1} parent=0 // pred_region
    _
  $region33: #{text_encoder_forward.1} parent=0 // pred_fallthru
    _
  // Predicated region
  $region34: #{text_encoder_forward.1} parent=0 // pred_check
    _
  $region35: #{text_encoder_forward.1} parent=0 // pred_check_branch
    %32 = sbr.rel (0) target = $region37
  $region36: #{text_encoder_forward.1} parent=0 // pred_region
    _
  $region37: #{text_encoder_forward.1} parent=0 // pred_fallthru
    _
  // Predicated region
  $region38: #{text_encoder_forward.1} parent=0 // pred_check
    _
  $region39: #{text_encoder_forward.1} parent=0 // pred_check_branch
    %34 = sbr.rel (0) target = $region41
  $region40: #{text_encoder_forward.1} parent=0 // pred_region
    _
  $region41: #{text_encoder_forward.1} parent=0 // pred_fallthru
    _
  %v36 = vld [vmem:[%s0] sm:$0xff]
  %v37 = vld [vmem:[%s0 + $0x8] sm:$0xff]
  %v38 = vld [vmem:[%s1] sm:$0xff]
  %v39 = vld [vmem:[%s1 + $0x8] sm:$0xff]
  %v40 = vld [vmem:[%s2] sm:$0xff]
  %v41 = vld [vmem:[%s3] sm:$0xf]
  %v42 = vld [vmem:[%s3 + $0x4] sm:$0xf]
  %v43 = vld [vmem:[%s3 + $0x8] sm:$0xf]
  %v44 = vld [vmem:[%s3 + $0xc] sm:$0xf]
  %v45 = vld [vmem:[%s4] sm:$0xf]
  %v46 = vld [vmem:[%s4 + $0x4] sm:$0xf]
  %v47 = vld [vmem:[%s4 + $0x8] sm:$0xf]
  %v48 = vld [vmem:[%s4 + $0xc] sm:$0xf]
  %v49 = vld [vmem:[%s5] sm:$0xf]
  %v50 = vld [vmem:[%s5 + $0x4] sm:$0xf]
  %v51 = vld [vmem:[%s5 + $0x8] sm:$0xf]
  %v52 = vld [vmem:[%s5 + $0xc] sm:$0xf]
  %v53 = vld [vmem:[%s6] sm:$0xf]
  %v54 = vld [vmem:[%s6 + $0x4] sm:$0xf]
  %v55 = vld [vmem:[%s6 + $0x8] sm:$0xf]
  %v56 = vld [vmem:[%s6 + $0xc] sm:$0xf]
  %v57 = vld [vmem:[%s6 + $0x10] sm:$0xf]
  %v58 = vld [vmem:[%s6 + $0x14] sm:$0xf]
  %v59 = vld [vmem:[%s6 + $0x18] sm:$0xf]
  %v60 = vld [vmem:[%s6 + $0x1c] sm:$0xf]
  %v61 = vld [vmem:[%s6 + $0x20] sm:$0xf]
  %v62 = vld [vmem:[%s6 + $0x24] sm:$0xf]
  %v63 = vld [vmem:[%s6 + $0x28] sm:$0xf]
  %v64 = vld [vmem:[%s6 + $0x2c] sm:$0xf]
  %v65 = vld [vmem:[%s6 + $0x30] sm:$0xf]
  %v66 = vld [vmem:[%s6 + $0x34] sm:$0xf]
  %v67 = vld [vmem:[%s6 + $0x38] sm:$0xf]
  %v68 = vld [vmem:[%s6 + $0x3c] sm:$0xf]
  %vm69 = vcmask 261120
  %v70 = vsel %vm69, %v36, 0.0
  %71 = vadd.xlane.f32.xlu0 %v70
  %v72 = vpop.xlane.xlu0 %71
  %v73 = vsel %vm69, %v37, 0.0
  %74 = vadd.xlane.f32.xlu0 %v73
  %v75 = vpop.xlane.xlu0 %74
  %v76 = vrcp.pop 32.0
  %v77 = vmul.f32 %v72, %v76
  %v78 = vmul.f32 %v75, %v76
  %v79 = vsub.f32 %v36, %v77
  %v80 = vsub.f32 %v37, %v78
  %v81 = vmul.f32 %v79, %v79
  %v82 = vmul.f32 %v80, %v80
  %v83 = vsel %vm69, %v81, 0.0
  %84 = vadd.xlane.f32.xlu0 %v83
  %v85 = vpop.xlane.xlu0 %84
  %v86 = vsel %vm69, %v82, 0.0
  %87 = vadd.xlane.f32.xlu0 %v86
  %v88 = vpop.xlane.xlu0 %87
  %v89 = vmul.f32 %v85, %v76
  %v90 = vmul.f32 %v88, %v76
  %v91 = vadd.f32 %v89, 1e-05
  %v92 = vadd.f32 %v90, 1e-05
  %v93 = vrsqrt.pop %v91
  %v94 = vrsqrt.pop %v92
  %v95 = vmul.f32 %v79, %v93
  %v96 = vmul.f32 %v80, %v94
  %v97 = vlaneseq
  %v98 = vshrl.u32 %v97, 7
  %v99 = vsub.s32 0, %v98
  %v100 = vrot.slane %v40, %v99
  %v101 = vmul.f32 %v95, %v100
  %v102 = vmul.f32 %v96, %v100
  %v103 = vlaneseq
  %v104 = vshrl.u32 %v103, 7
  %v105 = vsub.s32 1, %v104
  %v106 = vrot.slane %v40, %v105
  %v107 = vadd.f32 %v101, %v106
  %v108 = vadd.f32 %v102, %v106
  %v109 = vpack.c.bf16 %v108, %v107
  %v110 = vlaneseq
  %v111 = vshrl.u32 %v110, 7
  %v112 = vsub.s32 2, %v111
  %v113 = vrot.slane %v40, %v112
  %v118 = vunpack.c.l.b16 %v41
  %v119 = vunpack.c.l.b16 %v42
  %v120 = vunpack.c.l.b16 %v43
  %v121 = vunpack.c.l.b16 %v44
  %v122 = vpack.c.b16 %v119, %v118
  %v123 = vpack.c.b16 %v121, %v120
  %v127 = vsel %vm69, %v109, 0
  %129 = vmatprep.subr.bf16.mxu0 0
  %130 = vmatpush1.bf16.msra.mxu0 %v122
  %131 = vmatprep.subr.bf16.mxu0 0
  %132 = vmatpush1.bf16.msra.mxu0 %v123
  %133 = vmatprep.subr.bf16.mxu0 0
  %134 = vmatpush1.bf16.msra.mxu0 0
  %135 = vmatprep.subr.bf16.mxu0 0
  %136 = vmatpush1.bf16.msra.mxu0 0
  %137 = vmatprep.subr.bf16.mxu0 0
  %138 = vmatpush1.bf16.msra.mxu0 0
  %139 = vmatprep.subr.bf16.mxu0 0
  %140 = vmatpush1.bf16.msra.mxu0 0
  %141 = vmatprep.subr.bf16.mxu0 0
  %142 = vmatpush1.bf16.msra.mxu0 0
  %143 = vmatprep.subr.bf16.mxu0 0
  %144 = vmatpush1.bf16.msra.mxu0 0
  %145 = vmatprep.subr.bf16.mxu0 0
  %146 = vmatpush1.bf16.msra.mxu0 0
  %147 = vmatprep.subr.bf16.mxu0 0
  %148 = vmatpush1.bf16.msra.mxu0 0
  %149 = vmatprep.subr.bf16.mxu0 0
  %150 = vmatpush1.bf16.msra.mxu0 0
  %151 = vmatprep.subr.bf16.mxu0 0
  %152 = vmatpush1.bf16.msra.mxu0 0
  %153 = vmatprep.subr.bf16.mxu0 0
  %154 = vmatpush1.bf16.msra.mxu0 0
  %155 = vmatprep.subr.bf16.mxu0 0
  %156 = vmatpush1.bf16.msra.mxu0 0
  %157 = vmatprep.subr.bf16.mxu0 0
  %158 = vmatpush1.bf16.msra.mxu0 0
  %159 = vmatprep.subr.bf16.mxu0 0
  %160 = vmatpush1.bf16.msra.mxu0 0
  %161 = vmatprep.mubr.bf16.mxu0 0
  %162 = vmatmul.mubr.bf16.gmra.mrb[0].mxu0 %v127
  %v163 = vpop.f32.mrb[0].mxu0
  %v164 = vadd.f32 %v113, %v163
  %v165 = vpop.f32.mrb[0].mxu0
  %v166 = vpop.f32.mrb[0].mxu0
  %v167 = vadd.f32 %v113, %v166
  %v168 = vpop.f32.mrb[0].mxu0
  %169 = vdwg.mxu0
  %v170 = vpack.c.bf16 %v167, %v164
  %172 = vrot.lane.b32.xlu0 %v170, 96
  %v173 = vpop.permute.xlu0 %172
  %vm174 = vcmask 64512
  %v176 = vsel %vm174, %v170, 0
  %v179 = vsel %vm174, %v173, 0
  %181 = vmatprep.subr.bf16.mxu0 0
  %182 = vmatpush1.bf16.xpose.msra.mxu0 %v179
  %183 = vmatprep.subr.bf16.mxu0 0
  %184 = vmatpush1.bf16.xpose.msra.mxu0 0
  %185 = vmatprep.subr.bf16.mxu0 0
  %186 = vmatpush1.bf16.xpose.msra.mxu0 0
  %187 = vmatprep.subr.bf16.mxu0 0
  %188 = vmatpush1.bf16.xpose.msra.mxu0 0
  %189 = vmatprep.subr.bf16.mxu0 0
  %190 = vmatpush1.bf16.xpose.msra.mxu0 0
  %191 = vmatprep.subr.bf16.mxu0 0
  %192 = vmatpush1.bf16.xpose.msra.mxu0 0
  %193 = vmatprep.subr.bf16.mxu0 0
  %194 = vmatpush1.bf16.xpose.msra.mxu0 0
  %195 = vmatprep.subr.bf16.mxu0 0
  %196 = vmatpush1.bf16.xpose.msra.mxu0 0
  %197 = vmatprep.subr.bf16.mxu0 0
  %198 = vmatpush1.bf16.xpose.msra.mxu0 0
  %199 = vmatprep.subr.bf16.mxu0 0
  %200 = vmatpush1.bf16.xpose.msra.mxu0 0
  %201 = vmatprep.subr.bf16.mxu0 0
  %202 = vmatpush1.bf16.xpose.msra.mxu0 0
  %203 = vmatprep.subr.bf16.mxu0 0
  %204 = vmatpush1.bf16.xpose.msra.mxu0 0
  %205 = vmatprep.subr.bf16.mxu0 0
  %206 = vmatpush1.bf16.xpose.msra.mxu0 0
  %207 = vmatprep.subr.bf16.mxu0 0
  %208 = vmatpush1.bf16.xpose.msra.mxu0 0
  %209 = vmatprep.subr.bf16.mxu0 0
  %210 = vmatpush1.bf16.xpose.msra.mxu0 0
  %211 = vmatprep.subr.bf16.mxu0 0
  %212 = vmatpush1.bf16.xpose.msra.mxu0 0
  %213 = vmatprep.mubr.bf16.mxu0 0
  %214 = vmatmul.mubr.bf16.gmra.mrb[0].mxu0 %v176
  %v215 = vpop.f32.mrb[0].mxu0
  %v216 = vadd.f32 %v38, %v215
  %v217 = vpop.f32.mrb[0].mxu0
  %v218 = vpop.f32.mrb[0].mxu0
  %v219 = vadd.f32 %v39, %v218
  %v220 = vpop.f32.mrb[0].mxu0
  %221 = vdwg.mxu0
  %vm222 = vcmask 130048
  %v223 = vsel %vm222, %v216, -inf
  %224 = vmax.xlane.f32.xlu0 %v223
  %v225 = vpop.xlane.xlu0 %224
  %v226 = vsel %vm222, %v219, -inf
  %227 = vmax.xlane.f32.xlu0 %v226
  %v228 = vpop.xlane.xlu0 %227
  %v229 = vsub.f32 %v216, %v225
  %v230 = vsub.f32 %v219, %v228
  %v231 = vmul.f32 %v229, 1.442695
  %v232 = vpow.pop %v231
  %v233 = vmul.f32 %v230, 1.442695
  %v234 = vpow.pop %v233
  %v235 = vsel %vm222, %v232, 0.0
  %236 = vadd.xlane.f32.xlu0 %v235
  %v237 = vpop.xlane.xlu0 %236
  %v238 = vsel %vm222, %v234, 0.0
  %239 = vadd.xlane.f32.xlu0 %v238
  %v240 = vpop.xlane.xlu0 %239
  %v241 = vrcp.pop %v237
  %v242 = vrcp.pop %v240
  %v243 = vmul.f32 %v232, %v241
  %v244 = vmul.f32 %v234, %v242
  %v245 = vpack.c.bf16 %v244, %v243
  %246 = vrot.lane.b32.xlu0 %v170, 64
  %v247 = vpop.permute.xlu0 %246
  %v250 = vsel %vm222, %v245, 0
  %252 = vmatprep.subr.bf16.mxu0 0
  %253 = vmatpush1.bf16.msra.mxu0 %v247
  %254 = vmatprep.subr.bf16.mxu0 0
  %255 = vmatpush1.bf16.msra.mxu0 0
  %256 = vmatprep.subr.bf16.mxu0 0
  %257 = vmatpush1.bf16.msra.mxu0 0
  %258 = vmatprep.subr.bf16.mxu0 0
  %259 = vmatpush1.bf16.msra.mxu0 0
  %260 = vmatprep.subr.bf16.mxu0 0
  %261 = vmatpush1.bf16.msra.mxu0 0
  %262 = vmatprep.subr.bf16.mxu0 0
  %263 = vmatpush1.bf16.msra.mxu0 0
  %264 = vmatprep.subr.bf16.mxu0 0
  %265 = vmatpush1.bf16.msra.mxu0 0
  %266 = vmatprep.subr.bf16.mxu0 0
  %267 = vmatpush1.bf16.msra.mxu0 0
  %268 = vmatprep.subr.bf16.mxu0 0
  %269 = vmatpush1.bf16.msra.mxu0 0
  %270 = vmatprep.subr.bf16.mxu0 0
  %271 = vmatpush1.bf16.msra.mxu0 0
  %272 = vmatprep.subr.bf16.mxu0 0
  %273 = vmatpush1.bf16.msra.mxu0 0
  %274 = vmatprep.subr.bf16.mxu0 0
  %275 = vmatpush1.bf16.msra.mxu0 0
  %276 = vmatprep.subr.bf16.mxu0 0
  %277 = vmatpush1.bf16.msra.mxu0 0
  %278 = vmatprep.subr.bf16.mxu0 0
  %279 = vmatpush1.bf16.msra.mxu0 0
  %280 = vmatprep.subr.bf16.mxu0 0
  %281 = vmatpush1.bf16.msra.mxu0 0
  %282 = vmatprep.subr.bf16.mxu0 0
  %283 = vmatpush1.bf16.msra.mxu0 0
  %284 = vmatprep.mubr.bf16.mxu0 0
  %285 = vmatmul.mubr.bf16.gmra.mrb[0].mxu0 %v250
  %v286 = vpop.f32.mrb[0].mxu0
  %v287 = vadd.f32 0.0, %v286
  %v288 = vpop.f32.mrb[0].mxu0
  %v289 = vpop.f32.mrb[0].mxu0
  %v290 = vadd.f32 0.0, %v289
  %v291 = vpop.f32.mrb[0].mxu0
  %292 = vdwg.mxu0
  %293 = vrot.lane.b32.xlu0 %v170, 120
  %v294 = vpop.permute.xlu0 %293
  %295 = vrot.lane.b32.xlu0 %v170, 88
  %v296 = vpop.permute.xlu0 %295
  %v298 = vsel %vm174, %v294, 0
  %v301 = vsel %vm174, %v296, 0
  %303 = vmatprep.subr.bf16.mxu0 0
  %304 = vmatpush1.bf16.xpose.msra.mxu0 %v301
  %305 = vmatprep.subr.bf16.mxu0 0
  %306 = vmatpush1.bf16.xpose.msra.mxu0 0
  %307 = vmatprep.subr.bf16.mxu0 0
  %308 = vmatpush1.bf16.xpose.msra.mxu0 0
  %309 = vmatprep.subr.bf16.mxu0 0
  %310 = vmatpush1.bf16.xpose.msra.mxu0 0
  %311 = vmatprep.subr.bf16.mxu0 0
  %312 = vmatpush1.bf16.xpose.msra.mxu0 0
  %313 = vmatprep.subr.bf16.mxu0 0
  %314 = vmatpush1.bf16.xpose.msra.mxu0 0
  %315 = vmatprep.subr.bf16.mxu0 0
  %316 = vmatpush1.bf16.xpose.msra.mxu0 0
  %317 = vmatprep.subr.bf16.mxu0 0
  %318 = vmatpush1.bf16.xpose.msra.mxu0 0
  %319 = vmatprep.subr.bf16.mxu0 0
  %320 = vmatpush1.bf16.xpose.msra.mxu0 0
  %321 = vmatprep.subr.bf16.mxu0 0
  %322 = vmatpush1.bf16.xpose.msra.mxu0 0
  %323 = vmatprep.subr.bf16.mxu0 0
  %324 = vmatpush1.bf16.xpose.msra.mxu0 0
  %325 = vmatprep.subr.bf16.mxu0 0
  %326 = vmatpush1.bf16.xpose.msra.mxu0 0
  %327 = vmatprep.subr.bf16.mxu0 0
  %328 = vmatpush1.bf16.xpose.msra.mxu0 0
  %329 = vmatprep.subr.bf16.mxu0 0
  %330 = vmatpush1.bf16.xpose.msra.mxu0 0
  %331 = vmatprep.subr.bf16.mxu0 0
  %332 = vmatpush1.bf16.xpose.msra.mxu0 0
  %333 = vmatprep.subr.bf16.mxu0 0
  %334 = vmatpush1.bf16.xpose.msra.mxu0 0
  %335 = vmatprep.mubr.bf16.mxu0 0
  %336 = vmatmul.mubr.bf16.gmra.mrb[0].mxu0 %v298
  %v337 = vpop.f32.mrb[0].mxu0
  %v338 = vadd.f32 %v38, %v337
  %v339 = vpop.f32.mrb[0].mxu0
  %v340 = vpop.f32.mrb[0].mxu0
  %v341 = vadd.f32 %v39, %v340
  %v342 = vpop.f32.mrb[0].mxu0
  %343 = vdwg.mxu0
  %v344 = vsel %vm222, %v338, -inf
  %345 = vmax.xlane.f32.xlu0 %v344
  %v346 = vpop.xlane.xlu0 %345
  %v347 = vsel %vm222, %v341, -inf
  %348 = vmax.xlane.f32.xlu0 %v347
  %v349 = vpop.xlane.xlu0 %348
  %v350 = vsub.f32 %v338, %v346
  %v351 = vsub.f32 %v341, %v349
  %v352 = vmul.f32 %v350, 1.442695
  %v353 = vpow.pop %v352
  %v354 = vmul.f32 %v351, 1.442695
  %v355 = vpow.pop %v354
  %v356 = vsel %vm222, %v353, 0.0
  %357 = vadd.xlane.f32.xlu0 %v356
  %v358 = vpop.xlane.xlu0 %357
  %v359 = vsel %vm222, %v355, 0.0
  %360 = vadd.xlane.f32.xlu0 %v359
  %v361 = vpop.xlane.xlu0 %360
  %v362 = vrcp.pop %v358
  %v363 = vrcp.pop %v361
  %v364 = vmul.f32 %v353, %v362
  %v365 = vmul.f32 %v355, %v363
  %v366 = vpack.c.bf16 %v365, %v364
  %367 = vrot.lane.b32.xlu0 %v170, 56
  %v368 = vpop.permute.xlu0 %367
  %v371 = vsel %vm222, %v366, 0
  %373 = vmatprep.subr.bf16.mxu0 0
  %374 = vmatpush1.bf16.msra.mxu0 %v368
  %375 = vmatprep.subr.bf16.mxu0 0
  %376 = vmatpush1.bf16.msra.mxu0 0
  %377 = vmatprep.subr.bf16.mxu0 0
  %378 = vmatpush1.bf16.msra.mxu0 0
  %379 = vmatprep.subr.bf16.mxu0 0
  %380 = vmatpush1.bf16.msra.mxu0 0
  %381 = vmatprep.subr.bf16.mxu0 0
  %382 = vmatpush1.bf16.msra.mxu0 0
  %383 = vmatprep.subr.bf16.mxu0 0
  %384 = vmatpush1.bf16.msra.mxu0 0
  %385 = vmatprep.subr.bf16.mxu0 0
  %386 = vmatpush1.bf16.msra.mxu0 0
  %387 = vmatprep.subr.bf16.mxu0 0
  %388 = vmatpush1.bf16.msra.mxu0 0
  %389 = vmatprep.subr.bf16.mxu0 0
  %390 = vmatpush1.bf16.msra.mxu0 0
  %391 = vmatprep.subr.bf16.mxu0 0
  %392 = vmatpush1.bf16.msra.mxu0 0
  %393 = vmatprep.subr.bf16.mxu0 0
  %394 = vmatpush1.bf16.msra.mxu0 0
  %395 = vmatprep.subr.bf16.mxu0 0
  %396 = vmatpush1.bf16.msra.mxu0 0
  %397 = vmatprep.subr.bf16.mxu0 0
  %398 = vmatpush1.bf16.msra.mxu0 0
  %399 = vmatprep.subr.bf16.mxu0 0
  %400 = vmatpush1.bf16.msra.mxu0 0
  %401 = vmatprep.subr.bf16.mxu0 0
  %402 = vmatpush1.bf16.msra.mxu0 0
  %403 = vmatprep.subr.bf16.mxu0 0
  %404 = vmatpush1.bf16.msra.mxu0 0
  %405 = vmatprep.mubr.bf16.mxu0 0
  %406 = vmatmul.mubr.bf16.gmra.mrb[0].mxu0 %v371
  %v407 = vpop.f32.mrb[0].mxu0
  %v408 = vadd.f32 0.0, %v407
  %v409 = vpop.f32.mrb[0].mxu0
  %v410 = vpop.f32.mrb[0].mxu0
  %v411 = vadd.f32 0.0, %v410
  %v412 = vpop.f32.mrb[0].mxu0
  %413 = vdwg.mxu0
  %414 = vrot.lane.b32.xlu0 %v170, 112
  %v415 = vpop.permute.xlu0 %414
  %416 = vrot.lane.b32.xlu0 %v170, 80
  %v417 = vpop.permute.xlu0 %416
  %v419 = vsel %vm174, %v415, 0
  %v422 = vsel %vm174, %v417, 0
  %424 = vmatprep.subr.bf16.mxu0 0
  %425 = vmatpush1.bf16.xpose.msra.mxu0 %v422
  %426 = vmatprep.subr.bf16.mxu0 0
  %427 = vmatpush1.bf16.xpose.msra.mxu0 0
  %428 = vmatprep.subr.bf16.mxu0 0
  %429 = vmatpush1.bf16.xpose.msra.mxu0 0
  %430 = vmatprep.subr.bf16.mxu0 0
  %431 = vmatpush1.bf16.xpose.msra.mxu0 0
  %432 = vmatprep.subr.bf16.mxu0 0
  %433 = vmatpush1.bf16.xpose.msra.mxu0 0
  %434 = vmatprep.subr.bf16.mxu0 0
  %435 = vmatpush1.bf16.xpose.msra.mxu0 0
  %436 = vmatprep.subr.bf16.mxu0 0
  %437 = vmatpush1.bf16.xpose.msra.mxu0 0
  %438 = vmatprep.subr.bf16.mxu0 0
  %439 = vmatpush1.bf16.xpose.msra.mxu0 0
  %440 = vmatprep.subr.bf16.mxu0 0
  %441 = vmatpush1.bf16.xpose.msra.mxu0 0
  %442 = vmatprep.subr.bf16.mxu0 0
  %443 = vmatpush1.bf16.xpose.msra.mxu0 0
  %444 = vmatprep.subr.bf16.mxu0 0
  %445 = vmatpush1.bf16.xpose.msra.mxu0 0
  %446 = vmatprep.subr.bf16.mxu0 0
  %447 = vmatpush1.bf16.xpose.msra.mxu0 0
  %448 = vmatprep.subr.bf16.mxu0 0
  %449 = vmatpush1.bf16.xpose.msra.mxu0 0
  %450 = vmatprep.subr.bf16.mxu0 0
  %451 = vmatpush1.bf16.xpose.msra.mxu0 0
  %452 = vmatprep.subr.bf16.mxu0 0
  %453 = vmatpush1.bf16.xpose.msra.mxu0 0
  %454 = vmatprep.subr.bf16.mxu0 0
  %455 = vmatpush1.bf16.xpose.msra.mxu0 0
  %456 = vmatprep.mubr.bf16.mxu0 0
  %457 = vmatmul.mubr.bf16.gmra.mrb[0].mxu0 %v419
  %v458 = vpop.f32.mrb[0].mxu0
  %v459 = vadd.f32 %v38, %v458
  %v460 = vpop.f32.mrb[0].mxu0
  %v461 = vpop.f32.mrb[0].mxu0
  %v462 = vadd.f32 %v39, %v461
  %v463 = vpop.f32.mrb[0].mxu0
  %464 = vdwg.mxu0
  %v465 = vsel %vm222, %v459, -inf
  %466 = vmax.xlane.f32.xlu0 %v465
  %v467 = vpop.xlane.xlu0 %466
  %v468 = vsel %vm222, %v462, -inf
  %469 = vmax.xlane.f32.xlu0 %v468
  %v470 = vpop.xlane.xlu0 %469
  %v471 = vsub.f32 %v459, %v467
  %v472 = vsub.f32 %v462, %v470
  %v473 = vmul.f32 %v471, 1.442695
  %v474 = vpow.pop %v473
  %v475 = vmul.f32 %v472, 1.442695
  %v476 = vpow.pop %v475
  %v477 = vsel %vm222, %v474, 0.0
  %478 = vadd.xlane.f32.xlu0 %v477
  %v479 = vpop.xlane.xlu0 %478
  %v480 = vsel %vm222, %v476, 0.0
  %481 = vadd.xlane.f32.xlu0 %v480
  %v482 = vpop.xlane.xlu0 %481
  %v483 = vrcp.pop %v479
  %v484 = vrcp.pop %v482
  %v485 = vmul.f32 %v474, %v483
  %v486 = vmul.f32 %v476, %v484
  %v487 = vpack.c.bf16 %v486, %v485
  %488 = vrot.lane.b32.xlu0 %v170, 48
  %v489 = vpop.permute.xlu0 %488
  %v492 = vsel %vm222, %v487, 0
  %494 = vmatprep.subr.bf16.mxu0 0
  %495 = vmatpush1.bf16.msra.mxu0 %v489
  %496 = vmatprep.subr.bf16.mxu0 0
  %497 = vmatpush1.bf16.msra.mxu0 0
  %498 = vmatprep.subr.bf16.mxu0 0
  %499 = vmatpush1.bf16.msra.mxu0 0
  %500 = vmatprep.subr.bf16.mxu0 0
  %501 = vmatpush1.bf16.msra.mxu0 0
  %502 = vmatprep.subr.bf16.mxu0 0
  %503 = vmatpush1.bf16.msra.mxu0 0
  %504 = vmatprep.subr.bf16.mxu0 0
  %505 = vmatpush1.bf16.msra.mxu0 0
  %506 = vmatprep.subr.bf16.mxu0 0
  %507 = vmatpush1.bf16.msra.mxu0 0
  %508 = vmatprep.subr.bf16.mxu0 0
  %509 = vmatpush1.bf16.msra.mxu0 0
  %510 = vmatprep.subr.bf16.mxu0 0
  %511 = vmatpush1.bf16.msra.mxu0 0
  %512 = vmatprep.subr.bf16.mxu0 0
  %513 = vmatpush1.bf16.msra.mxu0 0
  %514 = vmatprep.subr.bf16.mxu0 0
  %515 = vmatpush1.bf16.msra.mxu0 0
  %516 = vmatprep.subr.bf16.mxu0 0
  %517 = vmatpush1.bf16.msra.mxu0 0
  %518 = vmatprep.subr.bf16.mxu0 0
  %519 = vmatpush1.bf16.msra.mxu0 0
  %520 = vmatprep.subr.bf16.mxu0 0
  %521 = vmatpush1.bf16.msra.mxu0 0
  %522 = vmatprep.subr.bf16.mxu0 0
  %523 = vmatpush1.bf16.msra.mxu0 0
  %524 = vmatprep.subr.bf16.mxu0 0
  %525 = vmatpush1.bf16.msra.mxu0 0
  %526 = vmatprep.mubr.bf16.mxu0 0
  %527 = vmatmul.mubr.bf16.gmra.mrb[0].mxu0 %v492
  %v528 = vpop.f32.mrb[0].mxu0
  %v529 = vadd.f32 0.0, %v528
  %v530 = vpop.f32.mrb[0].mxu0
  %v531 = vpop.f32.mrb[0].mxu0
  %v532 = vadd.f32 0.0, %v531
  %v533 = vpop.f32.mrb[0].mxu0
  %534 = vdwg.mxu0
  %535 = vrot.lane.b32.xlu0 %v170, 104
  %v536 = vpop.permute.xlu0 %535
  %537 = vrot.lane.b32.xlu0 %v170, 72
  %v538 = vpop.permute.xlu0 %537
  %v540 = vsel %vm174, %v536, 0
  %v543 = vsel %vm174, %v538, 0
  %545 = vmatprep.subr.bf16.mxu0 0
  %546 = vmatpush1.bf16.xpose.msra.mxu0 %v543
  %547 = vmatprep.subr.bf16.mxu0 0
  %548 = vmatpush1.bf16.xpose.msra.mxu0 0
  %549 = vmatprep.subr.bf16.mxu0 0
  %550 = vmatpush1.bf16.xpose.msra.mxu0 0
  %551 = vmatprep.subr.bf16.mxu0 0
  %552 = vmatpush1.bf16.xpose.msra.mxu0 0
  %553 = vmatprep.subr.bf16.mxu0 0
  %554 = vmatpush1.bf16.xpose.msra.mxu0 0
  %555 = vmatprep.subr.bf16.mxu0 0
  %556 = vmatpush1.bf16.xpose.msra.mxu0 0
  %557 = vmatprep.subr.bf16.mxu0 0
  %558 = vmatpush1.bf16.xpose.msra.mxu0 0
  %559 = vmatprep.subr.bf16.mxu0 0
  %560 = vmatpush1.bf16.xpose.msra.mxu0 0
  %561 = vmatprep.subr.bf16.mxu0 0
  %562 = vmatpush1.bf16.xpose.msra.mxu0 0
  %563 = vmatprep.subr.bf16.mxu0 0
  %564 = vmatpush1.bf16.xpose.msra.mxu0 0
  %565 = vmatprep.subr.bf16.mxu0 0
  %566 = vmatpush1.bf16.xpose.msra.mxu0 0
  %567 = vmatprep.subr.bf16.mxu0 0
  %568 = vmatpush1.bf16.xpose.msra.mxu0 0
  %569 = vmatprep.subr.bf16.mxu0 0
  %570 = vmatpush1.bf16.xpose.msra.mxu0 0
  %571 = vmatprep.subr.bf16.mxu0 0
  %572 = vmatpush1.bf16.xpose.msra.mxu0 0
  %573 = vmatprep.subr.bf16.mxu0 0
  %574 = vmatpush1.bf16.xpose.msra.mxu0 0
  %575 = vmatprep.subr.bf16.mxu0 0
  %576 = vmatpush1.bf16.xpose.msra.mxu0 0
  %577 = vmatprep.mubr.bf16.mxu0 0
  %578 = vmatmul.mubr.bf16.gmra.mrb[0].mxu0 %v540
  %v579 = vpop.f32.mrb[0].mxu0
  %v580 = vadd.f32 %v38, %v579
  %v581 = vpop.f32.mrb[0].mxu0
  %v582 = vpop.f32.mrb[0].mxu0
  %v583 = vadd.f32 %v39, %v582
  %v584 = vpop.f32.mrb[0].mxu0
  %585 = vdwg.mxu0
  %v586 = vsel %vm222, %v580, -inf
  %587 = vmax.xlane.f32.xlu0 %v586
  %v588 = vpop.xlane.xlu0 %587
  %v589 = vsel %vm222, %v583, -inf
  %590 = vmax.xlane.f32.xlu0 %v589
  %v591 = vpop.xlane.xlu0 %590
  %v592 = vsub.f32 %v580, %v588
  %v593 = vsub.f32 %v583, %v591
  %v594 = vmul.f32 %v592, 1.442695
  %v595 = vpow.pop %v594
  %v596 = vmul.f32 %v593, 1.442695
  %v597 = vpow.pop %v596
  %v598 = vsel %vm222, %v595, 0.0
  %599 = vadd.xlane.f32.xlu0 %v598
  %v600 = vpop.xlane.xlu0 %599
  %v601 = vsel %vm222, %v597, 0.0
  %602 = vadd.xlane.f32.xlu0 %v601
  %v603 = vpop.xlane.xlu0 %602
  %v604 = vrcp.pop %v600
  %v605 = vrcp.pop %v603
  %v606 = vmul.f32 %v595, %v604
  %v607 = vmul.f32 %v597, %v605
  %v608 = vpack.c.bf16 %v607, %v606
  %609 = vrot.lane.b32.xlu0 %v170, 40
  %v610 = vpop.permute.xlu0 %609
  %v613 = vsel %vm222, %v608, 0
  %615 = vmatprep.subr.bf16.mxu0 0
  %616 = vmatpush1.bf16.msra.mxu0 %v610
  %617 = vmatprep.subr.bf16.mxu0 0
  %618 = vmatpush1.bf16.msra.mxu0 0
  %619 = vmatprep.subr.bf16.mxu0 0
  %620 = vmatpush1.bf16.msra.mxu0 0
  %621 = vmatprep.subr.bf16.mxu0 0
  %622 = vmatpush1.bf16.msra.mxu0 0
  %623 = vmatprep.subr.bf16.mxu0 0
  %624 = vmatpush1.bf16.msra.mxu0 0
  %625 = vmatprep.subr.bf16.mxu0 0
  %626 = vmatpush1.bf16.msra.mxu0 0
  %627 = vmatprep.subr.bf16.mxu0 0
  %628 = vmatpush1.bf16.msra.mxu0 0
  %629 = vmatprep.subr.bf16.mxu0 0
  %630 = vmatpush1.bf16.msra.mxu0 0
  %631 = vmatprep.subr.bf16.mxu0 0
  %632 = vmatpush1.bf16.msra.mxu0 0
  %633 = vmatprep.subr.bf16.mxu0 0
  %634 = vmatpush1.bf16.msra.mxu0 0
  %635 = vmatprep.subr.bf16.mxu0 0
  %636 = vmatpush1.bf16.msra.mxu0 0
  %637 = vmatprep.subr.bf16.mxu0 0
  %638 = vmatpush1.bf16.msra.mxu0 0
  %639 = vmatprep.subr.bf16.mxu0 0
  %640 = vmatpush1.bf16.msra.mxu0 0
  %641 = vmatprep.subr.bf16.mxu0 0
  %642 = vmatpush1.bf16.msra.mxu0 0
  %643 = vmatprep.subr.bf16.mxu0 0
  %644 = vmatpush1.bf16.msra.mxu0 0
  %645 = vmatprep.subr.bf16.mxu0 0
  %646 = vmatpush1.bf16.msra.mxu0 0
  %647 = vmatprep.mubr.bf16.mxu0 0
  %648 = vmatmul.mubr.bf16.gmra.mrb[0].mxu0 %v613
  %v649 = vpop.f32.mrb[0].mxu0
  %v650 = vadd.f32 0.0, %v649
  %v651 = vpop.f32.mrb[0].mxu0
  %v652 = vpop.f32.mrb[0].mxu0
  %v653 = vadd.f32 0.0, %v652
  %v654 = vpop.f32.mrb[0].mxu0
  %655 = vdwg.mxu0
  %658 = vrot.lane.b32.xlu0 %v408, 8
  %v659 = vpop.permute.xlu0 %658
  %660 = vrot.lane.b32.xlu0 %v411, 8
  %v661 = vpop.permute.xlu0 %660
  %666 = vrot.lane.b32.xlu0 %v529, 16
  %v667 = vpop.permute.xlu0 %666
  %668 = vrot.lane.b32.xlu0 %v532, 16
  %v669 = vpop.permute.xlu0 %668
  %674 = vrot.lane.b32.xlu0 %v650, 24
  %v675 = vpop.permute.xlu0 %674
  %676 = vrot.lane.b32.xlu0 %v653, 24
  %v677 = vpop.permute.xlu0 %676
  %v680 = vsel %vm174, %v287, %v659
  %v681 = vsel %vm174, %v290, %v661
  %v682 = vsel %vm222, %v680, %v667
  %v683 = vsel %vm222, %v681, %v669
  %vm684 = vcmask 195584
  %v685 = vsel %vm684, %v682, %v675
  %v686 = vsel %vm684, %v683, %v677
  %v687 = vpack.c.bf16 %v686, %v685
  %v692 = vunpack.c.l.b16 %v45
  %v693 = vunpack.c.l.b16 %v46
  %v694 = vunpack.c.l.b16 %v47
  %v695 = vunpack.c.l.b16 %v48
  %v696 = vpack.c.b16 %v693, %v692
  %v697 = vpack.c.b16 %v695, %v694
  %v701 = vsel %vm69, %v687, 0
  %703 = vmatprep.subr.bf16.mxu0 0
  %704 = vmatpush1.bf16.msra.mxu0 %v696
  %705 = vmatprep.subr.bf16.mxu0 0
  %706 = vmatpush1.bf16.msra.mxu0 %v697
  %707 = vmatprep.subr.bf16.mxu0 0
  %708 = vmatpush1.bf16.msra.mxu0 0
  %709 = vmatprep.subr.bf16.mxu0 0
  %710 = vmatpush1.bf16.msra.mxu0 0
  %711 = vmatprep.subr.bf16.mxu0 0
  %712 = vmatpush1.bf16.msra.mxu0 0
  %713 = vmatprep.subr.bf16.mxu0 0
  %714 = vmatpush1.bf16.msra.mxu0 0
  %715 = vmatprep.subr.bf16.mxu0 0
  %716 = vmatpush1.bf16.msra.mxu0 0
  %717 = vmatprep.subr.bf16.mxu0 0
  %718 = vmatpush1.bf16.msra.mxu0 0
  %719 = vmatprep.subr.bf16.mxu0 0
  %720 = vmatpush1.bf16.msra.mxu0 0
  %721 = vmatprep.subr.bf16.mxu0 0
  %722 = vmatpush1.bf16.msra.mxu0 0
  %723 = vmatprep.subr.bf16.mxu0 0
  %724 = vmatpush1.bf16.msra.mxu0 0
  %725 = vmatprep.subr.bf16.mxu0 0
  %726 = vmatpush1.bf16.msra.mxu0 0
  %727 = vmatprep.subr.bf16.mxu0 0
  %728 = vmatpush1.bf16.msra.mxu0 0
  %729 = vmatprep.subr.bf16.mxu0 0
  %730 = vmatpush1.bf16.msra.mxu0 0
  %731 = vmatprep.subr.bf16.mxu0 0
  %732 = vmatpush1.bf16.msra.mxu0 0
  %733 = vmatprep.subr.bf16.mxu0 0
  %734 = vmatpush1.bf16.msra.mxu0 0
  %735 = vmatprep.mubr.bf16.mxu0 0
  %736 = vmatmul.mubr.bf16.gmra.mrb[0].mxu0 %v701
  %v737 = vpop.f32.mrb[0].mxu0
  %v738 = vadd.f32 0.0, %v737
  %v739 = vpop.f32.mrb[0].mxu0
  %v740 = vpop.f32.mrb[0].mxu0
  %v741 = vadd.f32 0.0, %v740
  %v742 = vpop.f32.mrb[0].mxu0
  %743 = vdwg.mxu0
  %v744 = vadd.f32 %v36, %v738
  %v745 = vadd.f32 %v37, %v741
  %v746 = vlaneseq
  %v747 = vshrl.u32 %v746, 7
  %v748 = vsub.s32 3, %v747
  %v749 = vrot.slane %v40, %v748
  %v750 = vadd.f32 %v744, %v749
  %v751 = vadd.f32 %v745, %v749
  %v752 = vsel %vm69, %v750, 0.0
  %753 = vadd.xlane.f32.xlu0 %v752
  %v754 = vpop.xlane.xlu0 %753
  %v755 = vsel %vm69, %v751, 0.0
  %756 = vadd.xlane.f32.xlu0 %v755
  %v757 = vpop.xlane.xlu0 %756
  %v758 = vmul.f32 %v754, %v76
  %v759 = vmul.f32 %v757, %v76
  %v760 = vsub.f32 %v750, %v758
  %v761 = vsub.f32 %v751, %v759
  %v762 = vmul.f32 %v760, %v760
  %v763 = vmul.f32 %v761, %v761
  %v764 = vsel %vm69, %v762, 0.0
  %765 = vadd.xlane.f32.xlu0 %v764
  %v766 = vpop.xlane.xlu0 %765
  %v767 = vsel %vm69, %v763, 0.0
  %768 = vadd.xlane.f32.xlu0 %v767
  %v769 = vpop.xlane.xlu0 %768
  %v770 = vmul.f32 %v766, %v76
  %v771 = vmul.f32 %v769, %v76
  %v772 = vadd.f32 %v770, 1e-05
  %v773 = vadd.f32 %v771, 1e-05
  %v774 = vrsqrt.pop %v772
  %v775 = vrsqrt.pop %v773
  %v776 = vmul.f32 %v760, %v774
  %v777 = vmul.f32 %v761, %v775
  %v778 = vlaneseq
  %v779 = vshrl.u32 %v778, 7
  %v780 = vsub.s32 4, %v779
  %v781 = vrot.slane %v40, %v780
  %v782 = vmul.f32 %v776, %v781
  %v783 = vmul.f32 %v777, %v781
  %v784 = vlaneseq
  %v785 = vshrl.u32 %v784, 7
  %v786 = vsub.s32 5, %v785
  %v787 = vrot.slane %v40, %v786
  %v788 = vadd.f32 %v782, %v787
  %v789 = vadd.f32 %v783, %v787
  %v790 = vpack.c.bf16 %v789, %v788
  %v791 = vlaneseq
  %v792 = vshrl.u32 %v791, 7
  %v793 = vsub.s32 6, %v792
  %v794 = vrot.slane %v40, %v793
  %v799 = vunpack.c.l.b16 %v49
  %v800 = vunpack.c.l.b16 %v50
  %v801 = vunpack.c.l.b16 %v51
  %v802 = vunpack.c.l.b16 %v52
  %v803 = vpack.c.b16 %v800, %v799
  %v804 = vpack.c.b16 %v802, %v801
  %v808 = vsel %vm69, %v790, 0
  %810 = vmatprep.subr.bf16.mxu0 0
  %811 = vmatpush1.bf16.msra.mxu0 %v803
  %812 = vmatprep.subr.bf16.mxu0 0
  %813 = vmatpush1.bf16.msra.mxu0 %v804
  %814 = vmatprep.subr.bf16.mxu0 0
  %815 = vmatpush1.bf16.msra.mxu0 0
  %816 = vmatprep.subr.bf16.mxu0 0
  %817 = vmatpush1.bf16.msra.mxu0 0
  %818 = vmatprep.subr.bf16.mxu0 0
  %819 = vmatpush1.bf16.msra.mxu0 0
  %820 = vmatprep.subr.bf16.mxu0 0
  %821 = vmatpush1.bf16.msra.mxu0 0
  %822 = vmatprep.subr.bf16.mxu0 0
  %823 = vmatpush1.bf16.msra.mxu0 0
  %824 = vmatprep.subr.bf16.mxu0 0
  %825 = vmatpush1.bf16.msra.mxu0 0
  %826 = vmatprep.subr.bf16.mxu0 0
  %827 = vmatpush1.bf16.msra.mxu0 0
  %828 = vmatprep.subr.bf16.mxu0 0
  %829 = vmatpush1.bf16.msra.mxu0 0
  %830 = vmatprep.subr.bf16.mxu0 0
  %831 = vmatpush1.bf16.msra.mxu0 0
  %832 = vmatprep.subr.bf16.mxu0 0
  %833 = vmatpush1.bf16.msra.mxu0 0
  %834 = vmatprep.subr.bf16.mxu0 0
  %835 = vmatpush1.bf16.msra.mxu0 0
  %836 = vmatprep.subr.bf16.mxu0 0
  %837 = vmatpush1.bf16.msra.mxu0 0
  %838 = vmatprep.subr.bf16.mxu0 0
  %839 = vmatpush1.bf16.msra.mxu0 0
  %840 = vmatprep.subr.bf16.mxu0 0
  %841 = vmatpush1.bf16.msra.mxu0 0
  %842 = vmatprep.mubr.bf16.mxu0 0
  %843 = vmatmul.mubr.bf16.gmra.mrb[0].mxu0 %v808
  %v844 = vpop.f32.mrb[0].mxu0
  %v845 = vadd.f32 %v794, %v844
  %v846 = vpop.f32.mrb[0].mxu0
  %v847 = vpop.f32.mrb[0].mxu0
  %v848 = vadd.f32 %v794, %v847
  %v849 = vpop.f32.mrb[0].mxu0
  %850 = vdwg.mxu0
  %v851 = vmul.f32 %v845, 1.702
  %v852 = vmul.f32 %v848, 1.702
  %v853 = vxor.u32 %v851, 2147483648
  %v854 = vxor.u32 %v852, 2147483648
  %v855 = vmul.f32 %v853, 1.442695
  %v856 = vpow.pop %v855
  %v857 = vmul.f32 %v854, 1.442695
  %v858 = vpow.pop %v857
  %v859 = vadd.f32 %v856, 1.0
  %v860 = vadd.f32 %v858, 1.0
  %v861 = vrcp.pop %v859
  %v862 = vmul.f32 1.0, %v861
  %v863 = vrcp.pop %v860
  %v864 = vmul.f32 1.0, %v863
  %v865 = vmul.f32 %v845, %v862
  %v866 = vmul.f32 %v848, %v864
  %v867 = vpack.c.bf16 %v866, %v865
  %v868 = vlaneseq
  %v869 = vshrl.u32 %v868, 7
  %v870 = vsub.s32 7, %v869
  %v871 = vrot.slane %v40, %v870
  %v888 = vunpack.c.l.b16 %v53
  %v889 = vunpack.c.l.b16 %v54
  %v890 = vunpack.c.l.b16 %v55
  %v891 = vunpack.c.l.b16 %v56
  %v892 = vunpack.c.l.b16 %v57
  %v893 = vunpack.c.l.b16 %v58
  %v894 = vunpack.c.l.b16 %v59
  %v895 = vunpack.c.l.b16 %v60
  %v896 = vunpack.c.l.b16 %v61
  %v897 = vunpack.c.l.b16 %v62
  %v898 = vunpack.c.l.b16 %v63
  %v899 = vunpack.c.l.b16 %v64
  %v900 = vunpack.c.l.b16 %v65
  %v901 = vunpack.c.l.b16 %v66
  %v902 = vunpack.c.l.b16 %v67
  %v903 = vunpack.c.l.b16 %v68
  %v904 = vpack.c.b16 %v889, %v888
  %v905 = vpack.c.b16 %v891, %v890
  %v906 = vpack.c.b16 %v893, %v892
  %v907 = vpack.c.b16 %v895, %v894
  %v908 = vpack.c.b16 %v897, %v896
  %v909 = vpack.c.b16 %v899, %v898
  %v910 = vpack.c.b16 %v901, %v900
  %v911 = vpack.c.b16 %v903, %v902
  %920 = vmatprep.subr.bf16.mxu0 0
  %921 = vmatpush1.bf16.msra.mxu0 %v904
  %922 = vmatprep.subr.bf16.mxu0 0
  %923 = vmatpush1.bf16.msra.mxu0 %v905
  %924 = vmatprep.subr.bf16.mxu0 0
  %925 = vmatpush1.bf16.msra.mxu0 %v906
  %926 = vmatprep.subr.bf16.mxu0 0
  %927 = vmatpush1.bf16.msra.mxu0 %v907
  %928 = vmatprep.subr.bf16.mxu0 0
  %929 = vmatpush1.bf16.msra.mxu0 %v908
  %930 = vmatprep.subr.bf16.mxu0 0
  %931 = vmatpush1.bf16.msra.mxu0 %v909
  %932 = vmatprep.subr.bf16.mxu0 0
  %933 = vmatpush1.bf16.msra.mxu0 %v910
  %934 = vmatprep.subr.bf16.mxu0 0
  %935 = vmatpush1.bf16.msra.mxu0 %v911
  %936 = vmatprep.subr.bf16.mxu0 0
  %937 = vmatpush1.bf16.msra.mxu0 0
  %938 = vmatprep.subr.bf16.mxu0 0
  %939 = vmatpush1.bf16.msra.mxu0 0
  %940 = vmatprep.subr.bf16.mxu0 0
  %941 = vmatpush1.bf16.msra.mxu0 0
  %942 = vmatprep.subr.bf16.mxu0 0
  %943 = vmatpush1.bf16.msra.mxu0 0
  %944 = vmatprep.subr.bf16.mxu0 0
  %945 = vmatpush1.bf16.msra.mxu0 0
  %946 = vmatprep.subr.bf16.mxu0 0
  %947 = vmatpush1.bf16.msra.mxu0 0
  %948 = vmatprep.subr.bf16.mxu0 0
  %949 = vmatpush1.bf16.msra.mxu0 0
  %950 = vmatprep.subr.bf16.mxu0 0
  %951 = vmatpush1.bf16.msra.mxu0 0
  %952 = vmatprep.mubr.bf16.mxu0 0
  %953 = vmatmul.mubr.bf16.gmra.mrb[0].mxu0 %v867
  %v954 = vpop.f32.mrb[0].mxu0
  %v955 = vadd.f32 %v871, %v954
  %v956 = vpop.f32.mrb[0].mxu0
  %v957 = vpop.f32.mrb[0].mxu0
  %v958 = vadd.f32 %v871, %v957
  %v959 = vpop.f32.mrb[0].mxu0
  %960 = vdwg.mxu0
  %v961 = vadd.f32 %v750, %v955
  %v962 = vadd.f32 %v751, %v958
  %s963 = scalar_lea.vmem %s2, 8
  %v964 = vld [vmem:[%s963] sm:$0xff]
  %s965 = scalar_lea.vmem %s3, 16
  %v966 = vld [vmem:[%s965] sm:$0xf]
  %v967 = vld [vmem:[%s965 + $0x4] sm:$0xf]
  %v968 = vld [vmem:[%s965 + $0x8] sm:$0xf]
  %v969 = vld [vmem:[%s965 + $0xc] sm:$0xf]
  %s970 = scalar_lea.vmem %s4, 16
  %v971 = vld [vmem:[%s970] sm:$0xf]
  %v972 = vld [vmem:[%s970 + $0x4] sm:$0xf]
  %v973 = vld [vmem:[%s970 + $0x8] sm:$0xf]
  %v974 = vld [vmem:[%s970 + $0xc] sm:$0xf]
  %s975 = scalar_lea.vmem %s5, 16
  %v976 = vld [vmem:[%s975] sm:$0xf]
  %v977 = vld [vmem:[%s975 + $0x4] sm:$0xf]
  %v978 = vld [vmem:[%s975 + $0x8] sm:$0xf]
  %v979 = vld [vmem:[%s975 + $0xc] sm:$0xf]
  %s980 = scalar_lea.vmem %s6, 64
  %v981 = vld [vmem:[%s980] sm:$0xf]
  %v982 = vld [vmem:[%s980 + $0x4] sm:$0xf]
  %v983 = vld [vmem:[%s980 + $0x8] sm:$0xf]
  %v984 = vld [vmem:[%s980 + $0xc] sm:$0xf]
  %v985 = vld [vmem:[%s980 + $0x10] sm:$0xf]
  %v986 = vld [vmem:[%s980 + $0x14] sm:$0xf]
  %v987 = vld [vmem:[%s980 + $0x18] sm:$0xf]
  %v988 = vld [vmem:[%s980 + $0x1c] sm:$0xf]
  %v989 = vld [vmem:[%s980 + $0x20] sm:$0xf]
  %v990 = vld [vmem:[%s980 + $0x24] sm:$0xf]
  %v991 = vld [vmem:[%s980 + $0x28] sm:$0xf]
  %v992 = vld [vmem:[%s980 + $0x2c] sm:$0xf]
  %v993 = vld [vmem:[%s980 + $0x30] sm:$0xf]
  %v994 = vld [vmem:[%s980 + $0x34] sm:$0xf]
  %v995 = vld [vmem:[%s980 + $0x38] sm:$0xf]
  %v996 = vld [vmem:[%s980 + $0x3c] sm:$0xf]
  %v997 = vsel %vm69, %v961, 0.0
  %998 = vadd.xlane.f32.xlu0 %v997
  %v999 = vpop.xlane.xlu0 %998
  %v1000 = vsel %vm69, %v962, 0.0
  %1001 = vadd.xlane.f32.xlu0 %v1000
  %v1002 = vpop.xlane.xlu0 %1001
  %v1003 = vmul.f32 %v999, %v76
  %v1004 = vmul.f32 %v1002, %v76
  %v1005 = vsub.f32 %v961, %v1003
  %v1006 = vsub.f32 %v962, %v1004
  %v1007 = vmul.f32 %v1005, %v1005
  %v1008 = vmul.f32 %v1006, %v1006
  %v1009 = vsel %vm69, %v1007, 0.0
  %1010 = vadd.xlane.f32.xlu0 %v1009
  %v1011 = vpop.xlane.xlu0 %1010
  %v1012 = vsel %vm69, %v1008, 0.0
  %1013 = vadd.xlane.f32.xlu0 %v1012
  %v1014 = vpop.xlane.xlu0 %1013
  %v1015 = vmul.f32 %v1011, %v76
  %v1016 = vmul.f32 %v1014, %v76
  %v1017 = vadd.f32 %v1015, 1e-05
  %v1018 = vadd.f32 %v1016, 1e-05
  %v1019 = vrsqrt.pop %v1017
  %v1020 = vrsqrt.pop %v1018
  %v1021 = vmul.f32 %v1005, %v1019
  %v1022 = vmul.f32 %v1006, %v1020
  %v1023 = vlaneseq
  %v1024 = vshrl.u32 %v1023, 7
  %v1025 = vsub.s32 0, %v1024
  %v1026 = vrot.slane %v964, %v1025
  %v1027 = vmul.f32 %v1021, %v1026
  %v1028 = vmul.f32 %v1022, %v1026
  %v1029 = vlaneseq
  %v1030 = vshrl.u32 %v1029, 7
  %v1031 = vsub.s32 1, %v1030
  %v1032 = vrot.slane %v964, %v1031
  %v1033 = vadd.f32 %v1027, %v1032
  %v1034 = vadd.f32 %v1028, %v1032
  %v1035 = vpack.c.bf16 %v1034, %v1033
  %v1036 = vlaneseq
  %v1037 = vshrl.u32 %v1036, 7
  %v1038 = vsub.s32 2, %v1037
  %v1039 = vrot.slane %v964, %v1038
  %v1044 = vunpack.c.l.b16 %v966
  %v1045 = vunpack.c.l.b16 %v967
  %v1046 = vunpack.c.l.b16 %v968
  %v1047 = vunpack.c.l.b16 %v969
  %v1048 = vpack.c.b16 %v1045, %v1044
  %v1049 = vpack.c.b16 %v1047, %v1046
  %v1053 = vsel %vm69, %v1035, 0
  %1055 = vmatprep.subr.bf16.mxu0 0
  %1056 = vmatpush1.bf16.msra.mxu0 %v1048
  %1057 = vmatprep.subr.bf16.mxu0 0
  %1058 = vmatpush1.bf16.msra.mxu0 %v1049
  %1059 = vmatprep.subr.bf16.mxu0 0
  %1060 = vmatpush1.bf16.msra.mxu0 0
  %1061 = vmatprep.subr.bf16.mxu0 0
  %1062 = vmatpush1.bf16.msra.mxu0 0
  %1063 = vmatprep.subr.bf16.mxu0 0
  %1064 = vmatpush1.bf16.msra.mxu0 0
  %1065 = vmatprep.subr.bf16.mxu0 0
  %1066 = vmatpush1.bf16.msra.mxu0 0
  %1067 = vmatprep.subr.bf16.mxu0 0
  %1068 = vmatpush1.bf16.msra.mxu0 0
  %1069 = vmatprep.subr.bf16.mxu0 0
  %1070 = vmatpush1.bf16.msra.mxu0 0
  %1071 = vmatprep.subr.bf16.mxu0 0
  %1072 = vmatpush1.bf16.msra.mxu0 0
  %1073 = vmatprep.subr.bf16.mxu0 0
  %1074 = vmatpush1.bf16.msra.mxu0 0
  %1075 = vmatprep.subr.bf16.mxu0 0
  %1076 = vmatpush1.bf16.msra.mxu0 0
  %1077 = vmatprep.subr.bf16.mxu0 0
  %1078 = vmatpush1.bf16.msra.mxu0 0
  %1079 = vmatprep.subr.bf16.mxu0 0
  %1080 = vmatpush1.bf16.msra.mxu0 0
  %1081 = vmatprep.subr.bf16.mxu0 0
  %1082 = vmatpush1.bf16.msra.mxu0 0
  %1083 = vmatprep.subr.bf16.mxu0 0
  %1084 = vmatpush1.bf16.msra.mxu0 0
  %1085 = vmatprep.subr.bf16.mxu0 0
  %1086 = vmatpush1.bf16.msra.mxu0 0
  %1087 = vmatprep.mubr.bf16.mxu0 0
  %1088 = vmatmul.mubr.bf16.gmra.mrb[0].mxu0 %v1053
  %v1089 = vpop.f32.mrb[0].mxu0
  %v1090 = vadd.f32 %v1039, %v1089
  %v1091 = vpop.f32.mrb[0].mxu0
  %v1092 = vpop.f32.mrb[0].mxu0
  %v1093 = vadd.f32 %v1039, %v1092
  %v1094 = vpop.f32.mrb[0].mxu0
  %1095 = vdwg.mxu0
  %v1096 = vpack.c.bf16 %v1093, %v1090
  %1098 = vrot.lane.b32.xlu0 %v1096, 96
  %v1099 = vpop.permute.xlu0 %1098
  %v1101 = vsel %vm174, %v1096, 0
  %v1104 = vsel %vm174, %v1099, 0
  %1106 = vmatprep.subr.bf16.mxu0 0
  %1107 = vmatpush1.bf16.xpose.msra.mxu0 %v1104
  %1108 = vmatprep.subr.bf16.mxu0 0
  %1109 = vmatpush1.bf16.xpose.msra.mxu0 0
  %1110 = vmatprep.subr.bf16.mxu0 0
  %1111 = vmatpush1.bf16.xpose.msra.mxu0 0
  %1112 = vmatprep.subr.bf16.mxu0 0
  %1113 = vmatpush1.bf16.xpose.msra.mxu0 0
  %1114 = vmatprep.subr.bf16.mxu0 0
  %1115 = vmatpush1.bf16.xpose.msra.mxu0 0
  %1116 = vmatprep.subr.bf16.mxu0 0
  %1117 = vmatpush1.bf16.xpose.msra.mxu0 0
  %1118 = vmatprep.subr.bf16.mxu0 0
  %1119 = vmatpush1.bf16.xpose.msra.mxu0 0
  %1120 = vmatprep.subr.bf16.mxu0 0
  %1121 = vmatpush1.bf16.xpose.msra.mxu0 0
  %1122 = vmatprep.subr.bf16.mxu0 0
  %1123 = vmatpush1.bf16.xpose.msra.mxu0 0
  %1124 = vmatprep.subr.bf16.mxu0 0
  %1125 = vmatpush1.bf16.xpose.msra.mxu0 0
  %1126 = vmatprep.subr.bf16.mxu0 0
  %1127 = vmatpush1.bf16.xpose.msra.mxu0 0
  %1128 = vmatprep.subr.bf16.mxu0 0
  %1129 = vmatpush1.bf16.xpose.msra.mxu0 0
  %1130 = vmatprep.subr.bf16.mxu0 0
  %1131 = vmatpush1.bf16.xpose.msra.mxu0 0
  %1132 = vmatprep.subr.bf16.mxu0 0
  %1133 = vmatpush1.bf16.xpose.msra.mxu0 0
  %1134 = vmatprep.subr.bf16.mxu0 0
  %1135 = vmatpush1.bf16.xpose.msra.mxu0 0
  %1136 = vmatprep.subr.bf16.mxu0 0
  %1137 = vmatpush1.bf16.xpose.msra.mxu0 0
  %1138 = vmatprep.mubr.bf16.mxu0 0
  %1139 = vmatmul.mubr.bf16.gmra.mrb[0].mxu0 %v1101
  %v1140 = vpop.f32.mrb[0].mxu0
  %v1141 = vadd.f32 %v38, %v1140
  %v1142 = vpop.f32.mrb[0].mxu0
  %v1143 = vpop.f32.mrb[0].mxu0
  %v1144 = vadd.f32 %v39, %v1143
  %v1145 = vpop.f32.mrb[0].mxu0
  %1146 = vdwg.mxu0
  %v1147 = vsel %vm222, %v1141, -inf
  %1148 = vmax.xlane.f32.xlu0 %v1147
  %v1149 = vpop.xlane.xlu0 %1148
  %v1150 = vsel %vm222, %v1144, -inf
  %1151 = vmax.xlane.f32.xlu0 %v1150
  %v1152 = vpop.xlane.xlu0 %1151
  %v1153 = vsub.f32 %v1141, %v1149
  %v1154 = vsub.f32 %v1144, %v1152
  %v1155 = vmul.f32 %v1153, 1.442695
  %v1156 = vpow.pop %v1155
  %v1157 = vmul.f32 %v1154, 1.442695
  %v1158 = vpow.pop %v1157
  %v1159 = vsel %vm222, %v1156, 0.0
  %1160 = vadd.xlane.f32.xlu0 %v1159
  %v1161 = vpop.xlane.xlu0 %1160
  %v1162 = vsel %vm222, %v1158, 0.0
  %1163 = vadd.xlane.f32.xlu0 %v1162
  %v1164 = vpop.xlane.xlu0 %1163
  %v1165 = vrcp.pop %v1161
  %v1166 = vrcp.pop %v1164
  %v1167 = vmul.f32 %v1156, %v1165
  %v1168 = vmul.f32 %v1158, %v1166
  %v1169 = vpack.c.bf16 %v1168, %v1167
  %1170 = vrot.lane.b32.xlu0 %v1096, 64
  %v1171 = vpop.permute.xlu0 %1170
  %v1174 = vsel %vm222, %v1169, 0
  %1176 = vmatprep.subr.bf16.mxu0 0
  %1177 = vmatpush1.bf16.msra.mxu0 %v1171
  %1178 = vmatprep.subr.bf16.mxu0 0
  %1179 = vmatpush1.bf16.msra.mxu0 0
  %1180 = vmatprep.subr.bf16.mxu0 0
  %1181 = vmatpush1.bf16.msra.mxu0 0
  %1182 = vmatprep.subr.bf16.mxu0 0
  %1183 = vmatpush1.bf16.msra.mxu0 0
  %1184 = vmatprep.subr.bf16.mxu0 0
  %1185 = vmatpush1.bf16.msra.mxu0 0
  %1186 = vmatprep.subr.bf16.mxu0 0
  %1187 = vmatpush1.bf16.msra.mxu0 0
  %1188 = vmatprep.subr.bf16.mxu0 0
  %1189 = vmatpush1.bf16.msra.mxu0 0
  %1190 = vmatprep.subr.bf16.mxu0 0
  %1191 = vmatpush1.bf16.msra.mxu0 0
  %1192 = vmatprep.subr.bf16.mxu0 0
  %1193 = vmatpush1.bf16.msra.mxu0 0
  %1194 = vmatprep.subr.bf16.mxu0 0
  %1195 = vmatpush1.bf16.msra.mxu0 0
  %1196 = vmatprep.subr.bf16.mxu0 0
  %1197 = vmatpush1.bf16.msra.mxu0 0
  %1198 = vmatprep.subr.bf16.mxu0 0
  %1199 = vmatpush1.bf16.msra.mxu0 0
  %1200 = vmatprep.subr.bf16.mxu0 0
  %1201 = vmatpush1.bf16.msra.mxu0 0
  %1202 = vmatprep.subr.bf16.mxu0 0
  %1203 = vmatpush1.bf16.msra.mxu0 0
  %1204 = vmatprep.subr.bf16.mxu0 0
  %1205 = vmatpush1.bf16.msra.mxu0 0
  %1206 = vmatprep.subr.bf16.mxu0 0
  %1207 = vmatpush1.bf16.msra.mxu0 0
  %1208 = vmatprep.mubr.bf16.mxu0 0
  %1209 = vmatmul.mubr.bf16.gmra.mrb[0].mxu0 %v1174
  %v1210 = vpop.f32.mrb[0].mxu0
  %v1211 = vadd.f32 0.0, %v1210
  %v1212 = vpop.f32.mrb[0].mxu0
  %v1213 = vpop.f32.mrb[0].mxu0
  %v1214 = vadd.f32 0.0, %v1213
  %v1215 = vpop.f32.mrb[0].mxu0
  %1216 = vdwg.mxu0
  %1217 = vrot.lane.b32.xlu0 %v1096, 120
  %v1218 = vpop.permute.xlu0 %1217
  %1219 = vrot.lane.b32.xlu0 %v1096, 88
  %v1220 = vpop.permute.xlu0 %1219
  %v1222 = vsel %vm174, %v1218, 0
  %v1225 = vsel %vm174, %v1220, 0
  %1227 = vmatprep.subr.bf16.mxu0 0
  %1228 = vmatpush1.bf16.xpose.msra.mxu0 %v1225
  %1229 = vmatprep.subr.bf16.mxu0 0
  %1230 = vmatpush1.bf16.xpose.msra.mxu0 0
  %1231 = vmatprep.subr.bf16.mxu0 0
  %1232 = vmatpush1.bf16.xpose.msra.mxu0 0
  %1233 = vmatprep.subr.bf16.mxu0 0
  %1234 = vmatpush1.bf16.xpose.msra.mxu0 0
  %1235 = vmatprep.subr.bf16.mxu0 0
  %1236 = vmatpush1.bf16.xpose.msra.mxu0 0
  %1237 = vmatprep.subr.bf16.mxu0 0
  %1238 = vmatpush1.bf16.xpose.msra.mxu0 0
  %1239 = vmatprep.subr.bf16.mxu0 0
  %1240 = vmatpush1.bf16.xpose.msra.mxu0 0
  %1241 = vmatprep.subr.bf16.mxu0 0
  %1242 = vmatpush1.bf16.xpose.msra.mxu0 0
  %1243 = vmatprep.subr.bf16.mxu0 0
  %1244 = vmatpush1.bf16.xpose.msra.mxu0 0
  %1245 = vmatprep.subr.bf16.mxu0 0
  %1246 = vmatpush1.bf16.xpose.msra.mxu0 0
  %1247 = vmatprep.subr.bf16.mxu0 0
  %1248 = vmatpush1.bf16.xpose.msra.mxu0 0
  %1249 = vmatprep.subr.bf16.mxu0 0
  %1250 = vmatpush1.bf16.xpose.msra.mxu0 0
  %1251 = vmatprep.subr.bf16.mxu0 0
  %1252 = vmatpush1.bf16.xpose.msra.mxu0 0
  %1253 = vmatprep.subr.bf16.mxu0 0
  %1254 = vmatpush1.bf16.xpose.msra.mxu0 0
  %1255 = vmatprep.subr.bf16.mxu0 0
  %1256 = vmatpush1.bf16.xpose.msra.mxu0 0
  %1257 = vmatprep.subr.bf16.mxu0 0
  %1258 = vmatpush1.bf16.xpose.msra.mxu0 0
  %1259 = vmatprep.mubr.bf16.mxu0 0
  %1260 = vmatmul.mubr.bf16.gmra.mrb[0].mxu0 %v1222
  %v1261 = vpop.f32.mrb[0].mxu0
  %v1262 = vadd.f32 %v38, %v1261
  %v1263 = vpop.f32.mrb[0].mxu0
  %v1264 = vpop.f32.mrb[0].mxu0
  %v1265 = vadd.f32 %v39, %v1264
  %v1266 = vpop.f32.mrb[0].mxu0
  %1267 = vdwg.mxu0
  %v1268 = vsel %vm222, %v1262, -inf
  %1269 = vmax.xlane.f32.xlu0 %v1268
  %v1270 = vpop.xlane.xlu0 %1269
  %v1271 = vsel %vm222, %v1265, -inf
  %1272 = vmax.xlane.f32.xlu0 %v1271
  %v1273 = vpop.xlane.xlu0 %1272
  %v1274 = vsub.f32 %v1262, %v1270
  %v1275 = vsub.f32 %v1265, %v1273
  %v1276 = vmul.f32 %v1274, 1.442695
  %v1277 = vpow.pop %v1276
  %v1278 = vmul.f32 %v1275, 1.442695
  %v1279 = vpow.pop %v1278
  %v1280 = vsel %vm222, %v1277, 0.0
  %1281 = vadd.xlane.f32.xlu0 %v1280
  %v1282 = vpop.xlane.xlu0 %1281
  %v1283 = vsel %vm222, %v1279, 0.0
  %1284 = vadd.xlane.f32.xlu0 %v1283
  %v1285 = vpop.xlane.xlu0 %1284
  %v1286 = vrcp.pop %v1282
  %v1287 = vrcp.pop %v1285
  %v1288 = vmul.f32 %v1277, %v1286
  %v1289 = vmul.f32 %v1279, %v1287
  %v1290 = vpack.c.bf16 %v1289, %v1288
  %1291 = vrot.lane.b32.xlu0 %v1096, 56
  %v1292 = vpop.permute.xlu0 %1291
  %v1295 = vsel %vm222, %v1290, 0
  %1297 = vmatprep.subr.bf16.mxu0 0
  %1298 = vmatpush1.bf16.msra.mxu0 %v1292
  %1299 = vmatprep.subr.bf16.mxu0 0
  %1300 = vmatpush1.bf16.msra.mxu0 0
  %1301 = vmatprep.subr.bf16.mxu0 0
  %1302 = vmatpush1.bf16.msra.mxu0 0
  %1303 = vmatprep.subr.bf16.mxu0 0
  %1304 = vmatpush1.bf16.msra.mxu0 0
  %1305 = vmatprep.subr.bf16.mxu0 0
  %1306 = vmatpush1.bf16.msra.mxu0 0
  %1307 = vmatprep.subr.bf16.mxu0 0
  %1308 = vmatpush1.bf16.msra.mxu0 0
  %1309 = vmatprep.subr.bf16.mxu0 0
  %1310 = vmatpush1.bf16.msra.mxu0 0
  %1311 = vmatprep.subr.bf16.mxu0 0
  %1312 = vmatpush1.bf16.msra.mxu0 0
  %1313 = vmatprep.subr.bf16.mxu0 0
  %1314 = vmatpush1.bf16.msra.mxu0 0
  %1315 = vmatprep.subr.bf16.mxu0 0
  %1316 = vmatpush1.bf16.msra.mxu0 0
  %1317 = vmatprep.subr.bf16.mxu0 0
  %1318 = vmatpush1.bf16.msra.mxu0 0
  %1319 = vmatprep.subr.bf16.mxu0 0
  %1320 = vmatpush1.bf16.msra.mxu0 0
  %1321 = vmatprep.subr.bf16.mxu0 0
  %1322 = vmatpush1.bf16.msra.mxu0 0
  %1323 = vmatprep.subr.bf16.mxu0 0
  %1324 = vmatpush1.bf16.msra.mxu0 0
  %1325 = vmatprep.subr.bf16.mxu0 0
  %1326 = vmatpush1.bf16.msra.mxu0 0
  %1327 = vmatprep.subr.bf16.mxu0 0
  %1328 = vmatpush1.bf16.msra.mxu0 0
  %1329 = vmatprep.mubr.bf16.mxu0 0
  %1330 = vmatmul.mubr.bf16.gmra.mrb[0].mxu0 %v1295
  %v1331 = vpop.f32.mrb[0].mxu0
  %v1332 = vadd.f32 0.0, %v1331
  %v1333 = vpop.f32.mrb[0].mxu0
  %v1334 = vpop.f32.mrb[0].mxu0
  %v1335 = vadd.f32 0.0, %v1334
  %v1336 = vpop.f32.mrb[0].mxu0
  %1337 = vdwg.mxu0
  %1338 = vrot.lane.b32.xlu0 %v1096, 112
  %v1339 = vpop.permute.xlu0 %1338
  %1340 = vrot.lane.b32.xlu0 %v1096, 80
  %v1341 = vpop.permute.xlu0 %1340
  %v1343 = vsel %vm174, %v1339, 0
  %v1346 = vsel %vm174, %v1341, 0
  %1348 = vmatprep.subr.bf16.mxu0 0
  %1349 = vmatpush1.bf16.xpose.msra.mxu0 %v1346
  %1350 = vmatprep.subr.bf16.mxu0 0
  %1351 = vmatpush1.bf16.xpose.msra.mxu0 0
  %1352 = vmatprep.subr.bf16.mxu0 0
  %1353 = vmatpush1.bf16.xpose.msra.mxu0 0
  %1354 = vmatprep.subr.bf16.mxu0 0
  %1355 = vmatpush1.bf16.xpose.msra.mxu0 0
  %1356 = vmatprep.subr.bf16.mxu0 0
  %1357 = vmatpush1.bf16.xpose.msra.mxu0 0
  %1358 = vmatprep.subr.bf16.mxu0 0
  %1359 = vmatpush1.bf16.xpose.msra.mxu0 0
  %1360 = vmatprep.subr.bf16.mxu0 0
  %1361 = vmatpush1.bf16.xpose.msra.mxu0 0
  %1362 = vmatprep.subr.bf16.mxu0 0
  %1363 = vmatpush1.bf16.xpose.msra.mxu0 0
  %1364 = vmatprep.subr.bf16.mxu0 0
  %1365 = vmatpush1.bf16.xpose.msra.mxu0 0
  %1366 = vmatprep.subr.bf16.mxu0 0
  %1367 = vmatpush1.bf16.xpose.msra.mxu0 0
  %1368 = vmatprep.subr.bf16.mxu0 0
  %1369 = vmatpush1.bf16.xpose.msra.mxu0 0
  %1370 = vmatprep.subr.bf16.mxu0 0
  %1371 = vmatpush1.bf16.xpose.msra.mxu0 0
  %1372 = vmatprep.subr.bf16.mxu0 0
  %1373 = vmatpush1.bf16.xpose.msra.mxu0 0
  %1374 = vmatprep.subr.bf16.mxu0 0
  %1375 = vmatpush1.bf16.xpose.msra.mxu0 0
  %1376 = vmatprep.subr.bf16.mxu0 0
  %1377 = vmatpush1.bf16.xpose.msra.mxu0 0
  %1378 = vmatprep.subr.bf16.mxu0 0
  %1379 = vmatpush1.bf16.xpose.msra.mxu0 0
  %1380 = vmatprep.mubr.bf16.mxu0 0
  %1381 = vmatmul.mubr.bf16.gmra.mrb[0].mxu0 %v1343
  %v1382 = vpop.f32.mrb[0].mxu0
  %v1383 = vadd.f32 %v38, %v1382
  %v1384 = vpop.f32.mrb[0].mxu0
  %v1385 = vpop.f32.mrb[0].mxu0
  %v1386 = vadd.f32 %v39, %v1385
  %v1387 = vpop.f32.mrb[0].mxu0
  %1388 = vdwg.mxu0
  %v1389 = vsel %vm222, %v1383, -inf
  %1390 = vmax.xlane.f32.xlu0 %v1389
  %v1391 = vpop.xlane.xlu0 %1390
  %v1392 = vsel %vm222, %v1386, -inf
  %1393 = vmax.xlane.f32.xlu0 %v1392
  %v1394 = vpop.xlane.xlu0 %1393
  %v1395 = vsub.f32 %v1383, %v1391
  %v1396 = vsub.f32 %v1386, %v1394
  %v1397 = vmul.f32 %v1395, 1.442695
  %v1398 = vpow.pop %v1397
  %v1399 = vmul.f32 %v1396, 1.442695
  %v1400 = vpow.pop %v1399
  %v1401 = vsel %vm222, %v1398, 0.0
  %1402 = vadd.xlane.f32.xlu0 %v1401
  %v1403 = vpop.xlane.xlu0 %1402
  %v1404 = vsel %vm222, %v1400, 0.0
  %1405 = vadd.xlane.f32.xlu0 %v1404
  %v1406 = vpop.xlane.xlu0 %1405
  %v1407 = vrcp.pop %v1403
  %v1408 = vrcp.pop %v1406
  %v1409 = vmul.f32 %v1398, %v1407
  %v1410 = vmul.f32 %v1400, %v1408
  %v1411 = vpack.c.bf16 %v1410, %v1409
  %1412 = vrot.lane.b32.xlu0 %v1096, 48
  %v1413 = vpop.permute.xlu0 %1412
  %v1416 = vsel %vm222, %v1411, 0
  %1418 = vmatprep.subr.bf16.mxu0 0
  %1419 = vmatpush1.bf16.msra.mxu0 %v1413
  %1420 = vmatprep.subr.bf16.mxu0 0
  %1421 = vmatpush1.bf16.msra.mxu0 0
  %1422 = vmatprep.subr.bf16.mxu0 0
  %1423 = vmatpush1.bf16.msra.mxu0 0
  %1424 = vmatprep.subr.bf16.mxu0 0
  %1425 = vmatpush1.bf16.msra.mxu0 0
  %1426 = vmatprep.subr.bf16.mxu0 0
  %1427 = vmatpush1.bf16.msra.mxu0 0
  %1428 = vmatprep.subr.bf16.mxu0 0
  %1429 = vmatpush1.bf16.msra.mxu0 0
  %1430 = vmatprep.subr.bf16.mxu0 0
  %1431 = vmatpush1.bf16.msra.mxu0 0
  %1432 = vmatprep.subr.bf16.mxu0 0
  %1433 = vmatpush1.bf16.msra.mxu0 0
  %1434 = vmatprep.subr.bf16.mxu0 0
  %1435 = vmatpush1.bf16.msra.mxu0 0
  %1436 = vmatprep.subr.bf16.mxu0 0
  %1437 = vmatpush1.bf16.msra.mxu0 0
  %1438 = vmatprep.subr.bf16.mxu0 0
  %1439 = vmatpush1.bf16.msra.mxu0 0
  %1440 = vmatprep.subr.bf16.mxu0 0
  %1441 = vmatpush1.bf16.msra.mxu0 0
  %1442 = vmatprep.subr.bf16.mxu0 0
  %1443 = vmatpush1.bf16.msra.mxu0 0
  %1444 = vmatprep.subr.bf16.mxu0 0
  %1445 = vmatpush1.bf16.msra.mxu0 0
  %1446 = vmatprep.subr.bf16.mxu0 0
  %1447 = vmatpush1.bf16.msra.mxu0 0
  %1448 = vmatprep.subr.bf16.mxu0 0
  %1449 = vmatpush1.bf16.msra.mxu0 0
  %1450 = vmatprep.mubr.bf16.mxu0 0
  %1451 = vmatmul.mubr.bf16.gmra.mrb[0].mxu0 %v1416
  %v1452 = vpop.f32.mrb[0].mxu0
  %v1453 = vadd.f32 0.0, %v1452
  %v1454 = vpop.f32.mrb[0].mxu0
  %v1455 = vpop.f32.mrb[0].mxu0
  %v1456 = vadd.f32 0.0, %v1455
  %v1457 = vpop.f32.mrb[0].mxu0
  %1458 = vdwg.mxu0
  %1459 = vrot.lane.b32.xlu0 %v1096, 104
  %v1460 = vpop.permute.xlu0 %1459
  %1461 = vrot.lane.b32.xlu0 %v1096, 72
  %v1462 = vpop.permute.xlu0 %1461
  %v1464 = vsel %vm174, %v1460, 0
  %v1467 = vsel %vm174, %v1462, 0
  %1469 = vmatprep.subr.bf16.mxu0 0
  %1470 = vmatpush1.bf16.xpose.msra.mxu0 %v1467
  %1471 = vmatprep.subr.bf16.mxu0 0
  %1472 = vmatpush1.bf16.xpose.msra.mxu0 0
  %1473 = vmatprep.subr.bf16.mxu0 0
  %1474 = vmatpush1.bf16.xpose.msra.mxu0 0
  %1475 = vmatprep.subr.bf16.mxu0 0
  %1476 = vmatpush1.bf16.xpose.msra.mxu0 0
  %1477 = vmatprep.subr.bf16.mxu0 0
  %1478 = vmatpush1.bf16.xpose.msra.mxu0 0
  %1479 = vmatprep.subr.bf16.mxu0 0
  %1480 = vmatpush1.bf16.xpose.msra.mxu0 0
  %1481 = vmatprep.subr.bf16.mxu0 0
  %1482 = vmatpush1.bf16.xpose.msra.mxu0 0
  %1483 = vmatprep.subr.bf16.mxu0 0
  %1484 = vmatpush1.bf16.xpose.msra.mxu0 0
  %1485 = vmatprep.subr.bf16.mxu0 0
  %1486 = vmatpush1.bf16.xpose.msra.mxu0 0
  %1487 = vmatprep.subr.bf16.mxu0 0
  %1488 = vmatpush1.bf16.xpose.msra.mxu0 0
  %1489 = vmatprep.subr.bf16.mxu0 0
  %1490 = vmatpush1.bf16.xpose.msra.mxu0 0
  %1491 = vmatprep.subr.bf16.mxu0 0
  %1492 = vmatpush1.bf16.xpose.msra.mxu0 0
  %1493 = vmatprep.subr.bf16.mxu0 0
  %1494 = vmatpush1.bf16.xpose.msra.mxu0 0
  %1495 = vmatprep.subr.bf16.mxu0 0
  %1496 = vmatpush1.bf16.xpose.msra.mxu0 0
  %1497 = vmatprep.subr.bf16.mxu0 0
  %1498 = vmatpush1.bf16.xpose.msra.mxu0 0
  %1499 = vmatprep.subr.bf16.mxu0 0
  %1500 = vmatpush1.bf16.xpose.msra.mxu0 0
  %1501 = vmatprep.mubr.bf16.mxu0 0
  %1502 = vmatmul.mubr.bf16.gmra.mrb[0].mxu0 %v1464
  %v1503 = vpop.f32.mrb[0].mxu0
  %v1504 = vadd.f32 %v38, %v1503
  %v1505 = vpop.f32.mrb[0].mxu0
  %v1506 = vpop.f32.mrb[0].mxu0
  %v1507 = vadd.f32 %v39, %v1506
  %v1508 = vpop.f32.mrb[0].mxu0
  %1509 = vdwg.mxu0
  %v1510 = vsel %vm222, %v1504, -inf
  %1511 = vmax.xlane.f32.xlu0 %v1510
  %v1512 = vpop.xlane.xlu0 %1511
  %v1513 = vsel %vm222, %v1507, -inf
  %1514 = vmax.xlane.f32.xlu0 %v1513
  %v1515 = vpop.xlane.xlu0 %1514
  %v1516 = vsub.f32 %v1504, %v1512
  %v1517 = vsub.f32 %v1507, %v1515
  %v1518 = vmul.f32 %v1516, 1.442695
  %v1519 = vpow.pop %v1518
  %v1520 = vmul.f32 %v1517, 1.442695
  %v1521 = vpow.pop %v1520
  %v1522 = vsel %vm222, %v1519, 0.0
  %1523 = vadd.xlane.f32.xlu0 %v1522
  %v1524 = vpop.xlane.xlu0 %1523
  %v1525 = vsel %vm222, %v1521, 0.0
  %1526 = vadd.xlane.f32.xlu0 %v1525
  %v1527 = vpop.xlane.xlu0 %1526
  %v1528 = vrcp.pop %v1524
  %v1529 = vrcp.pop %v1527
  %v1530 = vmul.f32 %v1519, %v1528
  %v1531 = vmul.f32 %v1521, %v1529
  %v1532 = vpack.c.bf16 %v1531, %v1530
  %1533 = vrot.lane.b32.xlu0 %v1096, 40
  %v1534 = vpop.permute.xlu0 %1533
  %v1537 = vsel %vm222, %v1532, 0
  %1539 = vmatprep.subr.bf16.mxu0 0
  %1540 = vmatpush1.bf16.msra.mxu0 %v1534
  %1541 = vmatprep.subr.bf16.mxu0 0
  %1542 = vmatpush1.bf16.msra.mxu0 0
  %1543 = vmatprep.subr.bf16.mxu0 0
  %1544 = vmatpush1.bf16.msra.mxu0 0
  %1545 = vmatprep.subr.bf16.mxu0 0
  %1546 = vmatpush1.bf16.msra.mxu0 0
  %1547 = vmatprep.subr.bf16.mxu0 0
  %1548 = vmatpush1.bf16.msra.mxu0 0
  %1549 = vmatprep.subr.bf16.mxu0 0
  %1550 = vmatpush1.bf16.msra.mxu0 0
  %1551 = vmatprep.subr.bf16.mxu0 0
  %1552 = vmatpush1.bf16.msra.mxu0 0
  %1553 = vmatprep.subr.bf16.mxu0 0
  %1554 = vmatpush1.bf16.msra.mxu0 0
  %1555 = vmatprep.subr.bf16.mxu0 0
  %1556 = vmatpush1.bf16.msra.mxu0 0
  %1557 = vmatprep.subr.bf16.mxu0 0
  %1558 = vmatpush1.bf16.msra.mxu0 0
  %1559 = vmatprep.subr.bf16.mxu0 0
  %1560 = vmatpush1.bf16.msra.mxu0 0
  %1561 = vmatprep.subr.bf16.mxu0 0
  %1562 = vmatpush1.bf16.msra.mxu0 0
  %1563 = vmatprep.subr.bf16.mxu0 0
  %1564 = vmatpush1.bf16.msra.mxu0 0
  %1565 = vmatprep.subr.bf16.mxu0 0
  %1566 = vmatpush1.bf16.msra.mxu0 0
  %1567 = vmatprep.subr.bf16.mxu0 0
  %1568 = vmatpush1.bf16.msra.mxu0 0
  %1569 = vmatprep.subr.bf16.mxu0 0
  %1570 = vmatpush1.bf16.msra.mxu0 0
  %1571 = vmatprep.mubr.bf16.mxu0 0
  %1572 = vmatmul.mubr.bf16.gmra.mrb[0].mxu0 %v1537
  %v1573 = vpop.f32.mrb[0].mxu0
  %v1574 = vadd.f32 0.0, %v1573
  %v1575 = vpop.f32.mrb[0].mxu0
  %v1576 = vpop.f32.mrb[0].mxu0
  %v1577 = vadd.f32 0.0, %v1576
  %v1578 = vpop.f32.mrb[0].mxu0
  %1579 = vdwg.mxu0
  %1582 = vrot.lane.b32.xlu0 %v1332, 8
  %v1583 = vpop.permute.xlu0 %1582
  %1584 = vrot.lane.b32.xlu0 %v1335, 8
  %v1585 = vpop.permute.xlu0 %1584
  %1590 = vrot.lane.b32.xlu0 %v1453, 16
  %v1591 = vpop.permute.xlu0 %1590
  %1592 = vrot.lane.b32.xlu0 %v1456, 16
  %v1593 = vpop.permute.xlu0 %1592
  %1598 = vrot.lane.b32.xlu0 %v1574, 24
  %v1599 = vpop.permute.xlu0 %1598
  %1600 = vrot.lane.b32.xlu0 %v1577, 24
  %v1601 = vpop.permute.xlu0 %1600
  %v1604 = vsel %vm174, %v1211, %v1583
  %v1605 = vsel %vm174, %v1214, %v1585
  %v1606 = vsel %vm222, %v1604, %v1591
  %v1607 = vsel %vm222, %v1605, %v1593
  %v1608 = vsel %vm684, %v1606, %v1599
  %v1609 = vsel %vm684, %v1607, %v1601
  %v1610 = vpack.c.bf16 %v1609, %v1608
  %v1615 = vunpack.c.l.b16 %v971
  %v1616 = vunpack.c.l.b16 %v972
  %v1617 = vunpack.c.l.b16 %v973
  %v1618 = vunpack.c.l.b16 %v974
  %v1619 = vpack.c.b16 %v1616, %v1615
  %v1620 = vpack.c.b16 %v1618, %v1617
  %v1624 = vsel %vm69, %v1610, 0
  %1626 = vmatprep.subr.bf16.mxu0 0
  %1627 = vmatpush1.bf16.msra.mxu0 %v1619
  %1628 = vmatprep.subr.bf16.mxu0 0
  %1629 = vmatpush1.bf16.msra.mxu0 %v1620
  %1630 = vmatprep.subr.bf16.mxu0 0
  %1631 = vmatpush1.bf16.msra.mxu0 0
  %1632 = vmatprep.subr.bf16.mxu0 0
  %1633 = vmatpush1.bf16.msra.mxu0 0
  %1634 = vmatprep.subr.bf16.mxu0 0
  %1635 = vmatpush1.bf16.msra.mxu0 0
  %1636 = vmatprep.subr.bf16.mxu0 0
  %1637 = vmatpush1.bf16.msra.mxu0 0
  %1638 = vmatprep.subr.bf16.mxu0 0
  %1639 = vmatpush1.bf16.msra.mxu0 0
  %1640 = vmatprep.subr.bf16.mxu0 0
  %1641 = vmatpush1.bf16.msra.mxu0 0
  %1642 = vmatprep.subr.bf16.mxu0 0
  %1643 = vmatpush1.bf16.msra.mxu0 0
  %1644 = vmatprep.subr.bf16.mxu0 0
  %1645 = vmatpush1.bf16.msra.mxu0 0
  %1646 = vmatprep.subr.bf16.mxu0 0
  %1647 = vmatpush1.bf16.msra.mxu0 0
  %1648 = vmatprep.subr.bf16.mxu0 0
  %1649 = vmatpush1.bf16.msra.mxu0 0
  %1650 = vmatprep.subr.bf16.mxu0 0
  %1651 = vmatpush1.bf16.msra.mxu0 0
  %1652 = vmatprep.subr.bf16.mxu0 0
  %1653 = vmatpush1.bf16.msra.mxu0 0
  %1654 = vmatprep.subr.bf16.mxu0 0
  %1655 = vmatpush1.bf16.msra.mxu0 0
  %1656 = vmatprep.subr.bf16.mxu0 0
  %1657 = vmatpush1.bf16.msra.mxu0 0
  %1658 = vmatprep.mubr.bf16.mxu0 0
  %1659 = vmatmul.mubr.bf16.gmra.mrb[0].mxu0 %v1624
  %v1660 = vpop.f32.mrb[0].mxu0
  %v1661 = vadd.f32 0.0, %v1660
  %v1662 = vpop.f32.mrb[0].mxu0
  %v1663 = vpop.f32.mrb[0].mxu0
  %v1664 = vadd.f32 0.0, %v1663
  %v1665 = vpop.f32.mrb[0].mxu0
  %1666 = vdwg.mxu0
  %v1667 = vadd.f32 %v961, %v1661
  %v1668 = vadd.f32 %v962, %v1664
  %v1669 = vlaneseq
  %v1670 = vshrl.u32 %v1669, 7
  %v1671 = vsub.s32 3, %v1670
  %v1672 = vrot.slane %v964, %v1671
  %v1673 = vadd.f32 %v1667, %v1672
  %v1674 = vadd.f32 %v1668, %v1672
  %v1675 = vsel %vm69, %v1673, 0.0
  %1676 = vadd.xlane.f32.xlu0 %v1675
  %v1677 = vpop.xlane.xlu0 %1676
  %v1678 = vsel %vm69, %v1674, 0.0
  %1679 = vadd.xlane.f32.xlu0 %v1678
  %v1680 = vpop.xlane.xlu0 %1679
  %v1681 = vmul.f32 %v1677, %v76
  %v1682 = vmul.f32 %v1680, %v76
  %v1683 = vsub.f32 %v1673, %v1681
  %v1684 = vsub.f32 %v1674, %v1682
  %v1685 = vmul.f32 %v1683, %v1683
  %v1686 = vmul.f32 %v1684, %v1684
  %v1687 = vsel %vm69, %v1685, 0.0
  %1688 = vadd.xlane.f32.xlu0 %v1687
  %v1689 = vpop.xlane.xlu0 %1688
  %v1690 = vsel %vm69, %v1686, 0.0
  %1691 = vadd.xlane.f32.xlu0 %v1690
  %v1692 = vpop.xlane.xlu0 %1691
  %v1693 = vmul.f32 %v1689, %v76
  %v1694 = vmul.f32 %v1692, %v76
  %v1695 = vadd.f32 %v1693, 1e-05
  %v1696 = vadd.f32 %v1694, 1e-05
  %v1697 = vrsqrt.pop %v1695
  %v1698 = vrsqrt.pop %v1696
  %v1699 = vmul.f32 %v1683, %v1697
  %v1700 = vmul.f32 %v1684, %v1698
  %v1701 = vlaneseq
  %v1702 = vshrl.u32 %v1701, 7
  %v1703 = vsub.s32 4, %v1702
  %v1704 = vrot.slane %v964, %v1703
  %v1705 = vmul.f32 %v1699, %v1704
  %v1706 = vmul.f32 %v1700, %v1704
  %v1707 = vlaneseq
  %v1708 = vshrl.u32 %v1707, 7
  %v1709 = vsub.s32 5, %v1708
  %v1710 = vrot.slane %v964, %v1709
  %v1711 = vadd.f32 %v1705, %v1710
  %v1712 = vadd.f32 %v1706, %v1710
  %v1713 = vpack.c.bf16 %v1712, %v1711
  %v1714 = vlaneseq
  %v1715 = vshrl.u32 %v1714, 7
  %v1716 = vsub.s32 6, %v1715
  %v1717 = vrot.slane %v964, %v1716
  %v1722 = vunpack.c.l.b16 %v976
  %v1723 = vunpack.c.l.b16 %v977
  %v1724 = vunpack.c.l.b16 %v978
  %v1725 = vunpack.c.l.b16 %v979
  %v1726 = vpack.c.b16 %v1723, %v1722
  %v1727 = vpack.c.b16 %v1725, %v1724
  %v1731 = vsel %vm69, %v1713, 0
  %1733 = vmatprep.subr.bf16.mxu0 0
  %1734 = vmatpush1.bf16.msra.mxu0 %v1726
  %1735 = vmatprep.subr.bf16.mxu0 0
  %1736 = vmatpush1.bf16.msra.mxu0 %v1727
  %1737 = vmatprep.subr.bf16.mxu0 0
  %1738 = vmatpush1.bf16.msra.mxu0 0
  %1739 = vmatprep.subr.bf16.mxu0 0
  %1740 = vmatpush1.bf16.msra.mxu0 0
  %1741 = vmatprep.subr.bf16.mxu0 0
  %1742 = vmatpush1.bf16.msra.mxu0 0
  %1743 = vmatprep.subr.bf16.mxu0 0
  %1744 = vmatpush1.bf16.msra.mxu0 0
  %1745 = vmatprep.subr.bf16.mxu0 0
  %1746 = vmatpush1.bf16.msra.mxu0 0
  %1747 = vmatprep.subr.bf16.mxu0 0
  %1748 = vmatpush1.bf16.msra.mxu0 0
  %1749 = vmatprep.subr.bf16.mxu0 0
  %1750 = vmatpush1.bf16.msra.mxu0 0
  %1751 = vmatprep.subr.bf16.mxu0 0
  %1752 = vmatpush1.bf16.msra.mxu0 0
  %1753 = vmatprep.subr.bf16.mxu0 0
  %1754 = vmatpush1.bf16.msra.mxu0 0
  %1755 = vmatprep.subr.bf16.mxu0 0
  %1756 = vmatpush1.bf16.msra.mxu0 0
  %1757 = vmatprep.subr.bf16.mxu0 0
  %1758 = vmatpush1.bf16.msra.mxu0 0
  %1759 = vmatprep.subr.bf16.mxu0 0
  %1760 = vmatpush1.bf16.msra.mxu0 0
  %1761 = vmatprep.subr.bf16.mxu0 0
  %1762 = vmatpush1.bf16.msra.mxu0 0
  %1763 = vmatprep.subr.bf16.mxu0 0
  %1764 = vmatpush1.bf16.msra.mxu0 0
  %1765 = vmatprep.mubr.bf16.mxu0 0
  %1766 = vmatmul.mubr.bf16.gmra.mrb[0].mxu0 %v1731
  %v1767 = vpop.f32.mrb[0].mxu0
  %v1768 = vadd.f32 %v1717, %v1767
  %v1769 = vpop.f32.mrb[0].mxu0
  %v1770 = vpop.f32.mrb[0].mxu0
  %v1771 = vadd.f32 %v1717, %v1770
  %v1772 = vpop.f32.mrb[0].mxu0
  %1773 = vdwg.mxu0
  %v1774 = vmul.f32 %v1768, 1.702
  %v1775 = vmul.f32 %v1771, 1.702
  %v1776 = vxor.u32 %v1774, 2147483648
  %v1777 = vxor.u32 %v1775, 2147483648
  %v1778 = vmul.f32 %v1776, 1.442695
  %v1779 = vpow.pop %v1778
  %v1780 = vmul.f32 %v1777, 1.442695
  %v1781 = vpow.pop %v1780
  %v1782 = vadd.f32 %v1779, 1.0
  %v1783 = vadd.f32 %v1781, 1.0
  %v1784 = vrcp.pop %v1782
  %v1785 = vmul.f32 1.0, %v1784
  %v1786 = vrcp.pop %v1783
  %v1787 = vmul.f32 1.0, %v1786
  %v1788 = vmul.f32 %v1768, %v1785
  %v1789 = vmul.f32 %v1771, %v1787
  %v1790 = vpack.c.bf16 %v1789, %v1788
  %v1791 = vlaneseq
  %v1792 = vshrl.u32 %v1791, 7
  %v1793 = vsub.s32 7, %v1792
  %v1794 = vrot.slane %v964, %v1793
  %v1811 = vunpack.c.l.b16 %v981
  %v1812 = vunpack.c.l.b16 %v982
  %v1813 = vunpack.c.l.b16 %v983
  %v1814 = vunpack.c.l.b16 %v984
  %v1815 = vunpack.c.l.b16 %v985
  %v1816 = vunpack.c.l.b16 %v986
  %v1817 = vunpack.c.l.b16 %v987
  %v1818 = vunpack.c.l.b16 %v988
  %v1819 = vunpack.c.l.b16 %v989
  %v1820 = vunpack.c.l.b16 %v990
  %v1821 = vunpack.c.l.b16 %v991
  %v1822 = vunpack.c.l.b16 %v992
  %v1823 = vunpack.c.l.b16 %v993
  %v1824 = vunpack.c.l.b16 %v994
  %v1825 = vunpack.c.l.b16 %v995
  %v1826 = vunpack.c.l.b16 %v996
  %v1827 = vpack.c.b16 %v1812, %v1811
  %v1828 = vpack.c.b16 %v1814, %v1813
  %v1829 = vpack.c.b16 %v1816, %v1815
  %v1830 = vpack.c.b16 %v1818, %v1817
  %v1831 = vpack.c.b16 %v1820, %v1819
  %v1832 = vpack.c.b16 %v1822, %v1821
  %v1833 = vpack.c.b16 %v1824, %v1823
  %v1834 = vpack.c.b16 %v1826, %v1825
  %1843 = vmatprep.subr.bf16.mxu0 0
  %1844 = vmatpush1.bf16.msra.mxu0 %v1827
  %1845 = vmatprep.subr.bf16.mxu0 0
  %1846 = vmatpush1.bf16.msra.mxu0 %v1828
  %1847 = vmatprep.subr.bf16.mxu0 0
  %1848 = vmatpush1.bf16.msra.mxu0 %v1829
  %1849 = vmatprep.subr.bf16.mxu0 0
  %1850 = vmatpush1.bf16.msra.mxu0 %v1830
  %1851 = vmatprep.subr.bf16.mxu0 0
  %1852 = vmatpush1.bf16.msra.mxu0 %v1831
  %1853 = vmatprep.subr.bf16.mxu0 0
  %1854 = vmatpush1.bf16.msra.mxu0 %v1832
  %1855 = vmatprep.subr.bf16.mxu0 0
  %1856 = vmatpush1.bf16.msra.mxu0 %v1833
  %1857 = vmatprep.subr.bf16.mxu0 0
  %1858 = vmatpush1.bf16.msra.mxu0 %v1834
  %1859 = vmatprep.subr.bf16.mxu0 0
  %1860 = vmatpush1.bf16.msra.mxu0 0
  %1861 = vmatprep.subr.bf16.mxu0 0
  %1862 = vmatpush1.bf16.msra.mxu0 0
  %1863 = vmatprep.subr.bf16.mxu0 0
  %1864 = vmatpush1.bf16.msra.mxu0 0
  %1865 = vmatprep.subr.bf16.mxu0 0
  %1866 = vmatpush1.bf16.msra.mxu0 0
  %1867 = vmatprep.subr.bf16.mxu0 0
  %1868 = vmatpush1.bf16.msra.mxu0 0
  %1869 = vmatprep.subr.bf16.mxu0 0
  %1870 = vmatpush1.bf16.msra.mxu0 0
  %1871 = vmatprep.subr.bf16.mxu0 0
  %1872 = vmatpush1.bf16.msra.mxu0 0
  %1873 = vmatprep.subr.bf16.mxu0 0
  %1874 = vmatpush1.bf16.msra.mxu0 0
  %1875 = vmatprep.mubr.bf16.mxu0 0
  %1876 = vmatmul.mubr.bf16.gmra.mrb[0].mxu0 %v1790
  %v1877 = vpop.f32.mrb[0].mxu0
  %v1878 = vadd.f32 %v1794, %v1877
  %v1879 = vpop.f32.mrb[0].mxu0
  %v1880 = vpop.f32.mrb[0].mxu0
  %v1881 = vadd.f32 %v1794, %v1880
  %v1882 = vpop.f32.mrb[0].mxu0
  %1883 = vdwg.mxu0
  %v1884 = vadd.f32 %v1673, %v1878
  %v1885 = vadd.f32 %v1674, %v1881
  %v1886 = vld [vmem:[%s7] sm:$0xff]
  %v1887 = vsel %vm69, %v1884, 0.0
  %1888 = vadd.xlane.f32.xlu0 %v1887
  %v1889 = vpop.xlane.xlu0 %1888
  %v1890 = vsel %vm69, %v1885, 0.0
  %1891 = vadd.xlane.f32.xlu0 %v1890
  %v1892 = vpop.xlane.xlu0 %1891
  %v1893 = vmul.f32 %v1889, %v76
  %v1894 = vmul.f32 %v1892, %v76
  %v1895 = vsub.f32 %v1884, %v1893
  %v1896 = vsub.f32 %v1885, %v1894
  %v1897 = vmul.f32 %v1895, %v1895
  %v1898 = vmul.f32 %v1896, %v1896
  %v1899 = vsel %vm69, %v1897, 0.0
  %1900 = vadd.xlane.f32.xlu0 %v1899
  %v1901 = vpop.xlane.xlu0 %1900
  %v1902 = vsel %vm69, %v1898, 0.0
  %1903 = vadd.xlane.f32.xlu0 %v1902
  %v1904 = vpop.xlane.xlu0 %1903
  %v1905 = vmul.f32 %v1901, %v76
  %v1906 = vmul.f32 %v1904, %v76
  %v1907 = vadd.f32 %v1905, 1e-05
  %v1908 = vadd.f32 %v1906, 1e-05
  %v1909 = vrsqrt.pop %v1907
  %v1910 = vrsqrt.pop %v1908
  %v1911 = vmul.f32 %v1895, %v1909
  %v1912 = vmul.f32 %v1896, %v1910
  %v1913 = vlaneseq
  %v1914 = vshrl.u32 %v1913, 7
  %v1915 = vsub.s32 0, %v1914
  %v1916 = vrot.slane %v1886, %v1915
  %v1917 = vmul.f32 %v1911, %v1916
  %v1918 = vmul.f32 %v1912, %v1916
  %v1919 = vlaneseq
  %v1920 = vshrl.u32 %v1919, 7
  %v1921 = vsub.s32 1, %v1920
  %v1922 = vrot.slane %v1886, %v1921
  %v1923 = vadd.f32 %v1917, %v1922
  %v1924 = vadd.f32 %v1918, %v1922
  %v1925 = vpack.c.bf16 %v1924, %v1923
  %v1926 = vld [vmem:[%s8] sm:$0xf]
  %v1927 = vld [vmem:[%s8 + $0x4] sm:$0xf]
  %v1928 = vld [vmem:[%s8 + $0x8] sm:$0xf]
  %v1929 = vld [vmem:[%s8 + $0xc] sm:$0xf]
  %v1930 = vpack.c.bf16 %v37, %v36
  %v1931 = vld [vmem:[%s9] sm:$0xf]
  %v1932 = vld [vmem:[%s9 + $0x4] sm:$0xf]
  %v1933 = vld [vmem:[%s9 + $0x8] sm:$0xf]
  %v1934 = vld [vmem:[%s9 + $0xc] sm:$0xf]
  %v1939 = vunpack.c.l.b16 %v1931
  %v1940 = vunpack.c.l.b16 %v1932
  %v1941 = vunpack.c.l.b16 %v1933
  %v1942 = vunpack.c.l.b16 %v1934
  %v1943 = vpack.c.b16 %v1940, %v1939
  %v1944 = vpack.c.b16 %v1942, %v1941
  %v1948 = vsel %vm69, %v1930, 0
  %1950 = vmatprep.subr.bf16.mxu0 0
  %1951 = vmatpush1.bf16.msra.mxu0 %v1943
  %1952 = vmatprep.subr.bf16.mxu0 0
  %1953 = vmatpush1.bf16.msra.mxu0 %v1944
  %1954 = vmatprep.subr.bf16.mxu0 0
  %1955 = vmatpush1.bf16.msra.mxu0 0
  %1956 = vmatprep.subr.bf16.mxu0 0
  %1957 = vmatpush1.bf16.msra.mxu0 0
  %1958 = vmatprep.subr.bf16.mxu0 0
  %1959 = vmatpush1.bf16.msra.mxu0 0
  %1960 = vmatprep.subr.bf16.mxu0 0
  %1961 = vmatpush1.bf16.msra.mxu0 0
  %1962 = vmatprep.subr.bf16.mxu0 0
  %1963 = vmatpush1.bf16.msra.mxu0 0
  %1964 = vmatprep.subr.bf16.mxu0 0
  %1965 = vmatpush1.bf16.msra.mxu0 0
  %1966 = vmatprep.subr.bf16.mxu0 0
  %1967 = vmatpush1.bf16.msra.mxu0 0
  %1968 = vmatprep.subr.bf16.mxu0 0
  %1969 = vmatpush1.bf16.msra.mxu0 0
  %1970 = vmatprep.subr.bf16.mxu0 0
  %1971 = vmatpush1.bf16.msra.mxu0 0
  %1972 = vmatprep.subr.bf16.mxu0 0
  %1973 = vmatpush1.bf16.msra.mxu0 0
  %1974 = vmatprep.subr.bf16.mxu0 0
  %1975 = vmatpush1.bf16.msra.mxu0 0
  %1976 = vmatprep.subr.bf16.mxu0 0
  %1977 = vmatpush1.bf16.msra.mxu0 0
  %1978 = vmatprep.subr.bf16.mxu0 0
  %1979 = vmatpush1.bf16.msra.mxu0 0
  %1980 = vmatprep.subr.bf16.mxu0 0
  %1981 = vmatpush1.bf16.msra.mxu0 0
  %1982 = vmatprep.mubr.bf16.mxu0 0
  %1983 = vmatmul.mubr.bf16.gmra.mrb[0].mxu0 %v1948
  %v1984 = vpop.f32.mrb[0].mxu0
  %v1985 = vadd.f32 0.0, %v1984
  %v1986 = vpop.f32.mrb[0].mxu0
  %v1987 = vpop.f32.mrb[0].mxu0
  %v1988 = vadd.f32 0.0, %v1987
  %v1989 = vpop.f32.mrb[0].mxu0
  %1990 = vdwg.mxu0
  %v1995 = vunpack.c.l.b16 %v1926
  %v1996 = vunpack.c.l.b16 %v1927
  %v1997 = vunpack.c.l.b16 %v1928
  %v1998 = vunpack.c.l.b16 %v1929
  %v1999 = vpack.c.b16 %v1996, %v1995
  %v2000 = vpack.c.b16 %v1998, %v1997
  %v2004 = vsel %vm69, %v1925, 0
  %2006 = vmatprep.subr.bf16.mxu0 0
  %2007 = vmatpush1.bf16.msra.mxu0 %v1999
  %2008 = vmatprep.subr.bf16.mxu0 0
  %2009 = vmatpush1.bf16.msra.mxu0 %v2000
  %2010 = vmatprep.subr.bf16.mxu0 0
  %2011 = vmatpush1.bf16.msra.mxu0 0
  %2012 = vmatprep.subr.bf16.mxu0 0
  %2013 = vmatpush1.bf16.msra.mxu0 0
  %2014 = vmatprep.subr.bf16.mxu0 0
  %2015 = vmatpush1.bf16.msra.mxu0 0
  %2016 = vmatprep.subr.bf16.mxu0 0
  %2017 = vmatpush1.bf16.msra.mxu0 0
  %2018 = vmatprep.subr.bf16.mxu0 0
  %2019 = vmatpush1.bf16.msra.mxu0 0
  %2020 = vmatprep.subr.bf16.mxu0 0
  %2021 = vmatpush1.bf16.msra.mxu0 0
  %2022 = vmatprep.subr.bf16.mxu0 0
  %2023 = vmatpush1.bf16.msra.mxu0 0
  %2024 = vmatprep.subr.bf16.mxu0 0
  %2025 = vmatpush1.bf16.msra.mxu0 0
  %2026 = vmatprep.subr.bf16.mxu0 0
  %2027 = vmatpush1.bf16.msra.mxu0 0
  %2028 = vmatprep.subr.bf16.mxu0 0
  %2029 = vmatpush1.bf16.msra.mxu0 0
  %2030 = vmatprep.subr.bf16.mxu0 0
  %2031 = vmatpush1.bf16.msra.mxu0 0
  %2032 = vmatprep.subr.bf16.mxu0 0
  %2033 = vmatpush1.bf16.msra.mxu0 0
  %2034 = vmatprep.subr.bf16.mxu0 0
  %2035 = vmatpush1.bf16.msra.mxu0 0
  %2036 = vmatprep.subr.bf16.mxu0 0
  %2037 = vmatpush1.bf16.msra.mxu0 0
  %2038 = vmatprep.mubr.bf16.mxu0 0
  %2039 = vmatmul.mubr.bf16.gmra.mrb[0].mxu0 %v2004
  %v2040 = vpop.f32.mrb[0].mxu0
  %v2041 = vadd.f32 %v1985, %v2040
  %v2042 = vpop.f32.mrb[0].mxu0
  %v2043 = vpop.f32.mrb[0].mxu0
  %v2044 = vadd.f32 %v1988, %v2043
  %v2045 = vpop.f32.mrb[0].mxu0
  %2046 = vdwg.mxu0
  %v2047 = vlaneseq
  %v2048 = vshrl.u32 %v2047, 7
  %v2049 = vsub.s32 2, %v2048
  %v2050 = vrot.slane %v1886, %v2049
  %v2051 = vadd.f32 %v2041, %v2050
  %v2052 = vadd.f32 %v2044, %v2050
  %2053 = vst [vmem:[%s10] sm:$0xff] %v2051
  %2054 = vst [vmem:[%s10 + $0x8] sm:$0xff] %v2052
  // Predicated region
  $region42: #{text_encoder_forward.1} parent=0 // pred_check
    _
  $region43: #{text_encoder_forward.1} parent=0 // pred_check_branch
    %2056 = sbr.rel (0) target = $region45
  $region44: #{text_encoder_forward.1} parent=0 // pred_region
    _
  $region45: #{text_encoder_forward.1} parent=0 // pred_fallthru
    _
  // Predicated region
  $region46: #{text_encoder_forward.1} parent=0 // pred_check
    _
  $region47: #{text_encoder_forward.1} parent=0 // pred_check_branch
    %2058 = sbr.rel (0) target = $region49
  $region48: #{text_encoder_forward.1} parent=0 // pred_region
    _
  $region49: #{text_encoder_forward.1} parent=0 // pred_fallthru
    _

</llo_original>
